<compile_context>
chip_gen: v7x
topology: tpu7x:2x2x1
jax: 0.10.0
libtpu: 0.0.40
codegen_flags: <defaults>
</compile_context>

<pallas_src>
import functools

import jax
import jax.numpy as jnp
from jax.experimental import pallas as pl
from jax.experimental.pallas import tpu as pltpu

_LANE = 128


def _round_up(x, m):
    return ((x + m - 1) // m) * m


def _vmem_capacity_bytes():
    """Physical VMEM per TensorCore; conservative 64 MiB (v7x) fallback."""
    try:
        return int(pltpu.get_tpu_info().vmem_capacity_bytes)
    except Exception:
        return 64 * 1024 * 1024


def _vmem_budgets():
    """(tile-selection budget, vmem_limit_bytes) sized per chip generation."""
    cap = _vmem_capacity_bytes()
    if cap >= 96 * 1024 * 1024:                     # v5e / v6e: 128 MiB per TC
        return 56 * 1024 * 1024, 100 * 1024 * 1024
    return 24 * 1024 * 1024, 56 * 1024 * 1024       # v7x: 64 MiB per TC


def _auto_tile_h(H, W, C, F2p, Fhp, Cp, budget_bytes, min_m=256):
    """Largest divisor of H whose per-tile VMEM footprint fits the budget,
    with a minimum matmul M (tile_h * W >= min_m) preference."""
    cpad = _round_up(C, _LANE)                       # lane padding of x blocks
    per_row = (2 * 2 * W * cpad                      # x main block, 2 bufs, bf16
               + 5 * 4 * W * F2p                     # t3/acc/s_l/s_r/shift (f32)
               + 2 * W * Fhp                         # gated activation (bf16)
               + 2 * 4 * W * Cp)                     # out block, 2 bufs, f32
    fixed = 2 * (2 * C * F2p + 2 * Fhp * Cp) + 8 * 4 * F2p + 2 * 4 * Cp
    max_th = max(1, (budget_bytes - fixed) // per_row)
    divs = [d for d in range(1, H + 1) if H % d == 0]
    fitting = [d for d in divs if d <= max_th]
    tile_h = max(fitting) if fitting else 1
    if tile_h * W < min_m:
        # avoid collapsing to a tiny matmul M: allow a modest budget overshoot
        bigger = [d for d in divs
                  if d * W >= min_m and d * per_row + fixed <= int(1.5 * budget_bytes)]
        if bigger:
            tile_h = min(bigger)
    return tile_h


def _ffn_kernel(x_main_ref, x_top_ref, x_bot_ref,
                w1_ref, b1_ref, wd_ref, bd_ref, w2_ref, b2_ref,
                o_ref, *, approximate_gelu=True):
    """One (batch, row-band) tile of the fused FeedForward.

    x_main_ref : (1, TH, W, C)  rows [i*TH, (i+1)*TH) of image b       (bf16)
    x_top_ref  : (1, 1,  W, C)  row i*TH - 1  (clamped at the border)  (bf16)
    x_bot_ref  : (1, 1,  W, C)  row (i+1)*TH  (clamped at the border)  (bf16)
    w1_ref     : (C,   F2p)   project_in weight, channel-split padded  (bf16)
    b1_ref     : (1,   F2p)                                            (f32)
    wd_ref     : (9,   F2p)   3x3 depthwise taps, row k = ky*3 + kx    (f32)
    bd_ref     : (1,   F2p)                                            (f32)
    w2_ref     : (Fhp, Cp)    project_out weight, padded               (bf16)
    b2_ref     : (1,   Cp)                                             (f32)
    o_ref      : (1, TH*W, Cp) lane-dense output slab
    """
    _, TH, W, C = x_main_ref.shape
    F2p = w1_ref.shape[1]
    Fhp = w2_ref.shape[0]
    Cp = w2_ref.shape[1]
    mm_dtype = w1_ref.dtype

    i = pl.program_id(1)
    n_tiles = pl.num_programs(1)

    # ---- project_in: halo rows + main band in ONE matmul (MXU, f32 accumulate) ----
    x3 = jnp.concatenate([x_top_ref[0], x_main_ref[0], x_bot_ref[0]], axis=0)  # (TH+2, W, C)
    t2d = jnp.dot(x3.reshape((TH + 2) * W, C).astype(mm_dtype), w1_ref[...],
                  preferred_element_type=jnp.float32) + b1_ref[...]
    t3 = t2d.reshape(TH + 2, W, F2p)

    # dwconv zero-pads its *input* (project_in output incl. bias b1), so at the
    # true image border the halo rows of t3 must be zero.  Single row-mask select
    # gated on the tile index.
    row = jax.lax.broadcasted_iota(jnp.int32, (TH + 2, W, 1), 0)
    kill = jnp.logical_or(jnp.logical_and(row == 0, i == 0),
                          jnp.logical_and(row == TH + 1, i == n_tiles - 1))
    t3 = jnp.where(kill, 0.0, t3)

    # ---- depthwise 3x3 conv, padding=1 (VPU, f32) ----
    wd = wd_ref[...]                                                  # (9, F2p)
    # centre input column (dx=1); centre tap initialises the accumulator
    acc = t3[1:TH + 1] * wd[4] + t3[0:TH] * wd[1] + t3[2:TH + 2] * wd[7]
    # pre-sum the three row taps of the left/right input columns, shift ONCE each
    # (explicit zero edge column == the conv's zero padding along W).
    s_l = t3[0:TH] * wd[0] + t3[1:TH + 1] * wd[3] + t3[2:TH + 2] * wd[6]
    s_r = t3[0:TH] * wd[2] + t3[1:TH + 1] * wd[5] + t3[2:TH + 2] * wd[8]
    zcol = jnp.zeros((TH, 1, F2p), jnp.float32)
    acc = acc + jnp.concatenate([zcol, s_l[:, :W - 1, :]], axis=1)    # input col w-1
    acc = acc + jnp.concatenate([s_r[:, 1:, :], zcol], axis=1)        # input col w+1
    acc = acc + bd_ref[...].reshape(1, 1, F2p)

    # ---- chunk(2, channel) + GELU gating ----
    # Fhp is a multiple of 128, so both slices are lane-tile aligned.
    x1 = acc[:, :, :Fhp]
    x2 = acc[:, :, Fhp:]
    g = jax.nn.gelu(x1, approximate=approximate_gelu)
    y = (g * x2).reshape(TH * W, Fhp).astype(mm_dtype)

    # ---- project_out: 1x1 conv == matmul (MXU, f32 accumulate), dense store ----
    out = jnp.dot(y, w2_ref[...], preferred_element_type=jnp.float32) + b2_ref[...]
    o_ref[...] = out.reshape(1, TH * W, Cp).astype(o_ref.dtype)


def feedforward_pallas(x, params, *, tile_h=None, matmul_dtype=jnp.bfloat16,
                       approximate_gelu=True, out_dtype=jnp.float32,
                       vmem_limit_bytes=None):
    """Fused IRNet FeedForward.  x: (B, H, W, C) NHWC."""
    w1, b1, wd, bd, w2, b2 = params
    B, H, W, C = x.shape
    F2 = w1.shape[1]
    Fh = F2 // 2
    if W % 8 != 0:
        # TODO(synk): pad W for widths that are not a multiple of the sublane size.
        raise ValueError("W must be a multiple of 8 (TPU sublane tiling).")

    # Pad hidden/output channel dims to lane width (zero-padded weights => same math).
    Fhp = _round_up(Fh, _LANE)
    Cp = _round_up(C, _LANE)
    F2p = 2 * Fhp

    f32 = jnp.float32
    # project_in weight/bias, split-packed so x1 lives in [0, Fhp) and x2 in [Fhp, 2*Fhp)
    w1p = jnp.zeros((C, F2p), matmul_dtype)
    w1p = w1p.at[:, :Fh].set(w1[:, :Fh].astype(matmul_dtype))
    w1p = w1p.at[:, Fhp:Fhp + Fh].set(w1[:, Fh:].astype(matmul_dtype))
    b1p = jnp.zeros((1, F2p), f32)
    b1p = b1p.at[:, :Fh].set(b1[:, :Fh]).at[:, Fhp:Fhp + Fh].set(b1[:, Fh:])
    wd9 = wd.reshape(9, F2)
    wdp = jnp.zeros((9, F2p), f32)
    wdp = wdp.at[:, :Fh].set(wd9[:, :Fh]).at[:, Fhp:Fhp + Fh].set(wd9[:, Fh:])
    bdp = jnp.zeros((1, F2p), f32)
    bdp = bdp.at[:, :Fh].set(bd[:, :Fh]).at[:, Fhp:Fhp + Fh].set(bd[:, Fh:])
    # project_out weight/bias, padded to (Fhp, Cp)
    w2p = jnp.zeros((Fhp, Cp), matmul_dtype).at[:Fh, :C].set(w2.astype(matmul_dtype))
    b2p = jnp.zeros((1, Cp), f32).at[:, :C].set(b2)

    # bf16 x halves the input DMA bytes and the x-block VMEM footprint.
    xk = x.astype(matmul_dtype)

    budget, limit = _vmem_budgets()
    if vmem_limit_bytes is None:
        vmem_limit_bytes = limit
    if tile_h is None:
        tile_h = _auto_tile_h(H, W, C, F2p, Fhp, Cp, budget)
    if H % tile_h != 0:
        raise ValueError(f"tile_h={tile_h} must divide H={H}")
    n_tiles = H // tile_h
    th = tile_h  # captured by the index maps below

    kernel = functools.partial(_ffn_kernel, approximate_gelu=approximate_gelu)

    out_padded = pl.pallas_call(
        kernel,
        out_shape=jax.ShapeDtypeStruct((B, H * W, Cp), out_dtype),
        grid=(B, n_tiles),
        in_specs=[
            # main tile_h-row band
            pl.BlockSpec((1, th, W, C), lambda b, i: (b, i, 0, 0)),
            # 1-row top / bottom halos; row index clamped at the border (the kernel
            # zeroes the corresponding t3 rows so the dwconv sees zero padding)
            pl.BlockSpec((1, 1, W, C),
                         lambda b, i: (b, jnp.maximum(i * th - 1, 0), 0, 0)),
            pl.BlockSpec((1, 1, W, C),
                         lambda b, i: (b, jnp.minimum(i * th + th, H - 1), 0, 0)),
            pl.BlockSpec((C, F2p), lambda b, i: (0, 0)),    # W1 (padded, bf16)
            pl.BlockSpec((1, F2p), lambda b, i: (0, 0)),    # b1
            pl.BlockSpec((9, F2p), lambda b, i: (0, 0)),    # depthwise taps
            pl.BlockSpec((1, F2p), lambda b, i: (0, 0)),    # bd
            pl.BlockSpec((Fhp, Cp), lambda b, i: (0, 0)),   # W2 (padded, bf16)
            pl.BlockSpec((1, Cp), lambda b, i: (0, 0)),     # b2
        ],
        out_specs=pl.BlockSpec((1, th * W, Cp), lambda b, i: (b, i, 0)),
        compiler_params=pltpu.CompilerParams(
            dimension_semantics=("parallel", "parallel"),
            vmem_limit_bytes=vmem_limit_bytes,
        ),
    )(xk, xk, xk, w1p, b1p, wdp, bdp, w2p, b2p)

    # strip channel padding, restore NHWC image layout (wrapper-side layout plumbing)
    return out_padded[:, :, :C].reshape(B, H, W, C)


def feedforward_reference(x, params, matmul_dtype=jnp.float32, approximate_gelu=False):
    """Pure-JAX NHWC reference with identical semantics (for validation)."""
    w1, b1, wd, bd, w2, b2 = params
    B, H, W, C = x.shape
    F2 = w1.shape[1]
    Fh = F2 // 2
    t = jnp.einsum('bhwc,cf->bhwf', x.astype(matmul_dtype), w1.astype(matmul_dtype),
                   preferred_element_type=jnp.float32) + b1.reshape(1, 1, 1, F2)
    tp = jnp.pad(t, ((0, 0), (1, 1), (1, 1), (0, 0)))
    acc = jnp.zeros_like(t)
    for dy in range(3):
        for dx in range(3):
            acc = acc + tp[:, dy:dy + H, dx:dx + W, :] * wd[dy, dx, :]
    acc = acc + bd.reshape(1, 1, 1, F2)
    x1, x2 = acc[..., :Fh], acc[..., Fh:]
    g = jax.nn.gelu(x1, approximate=approximate_gelu) * x2
    out = jnp.einsum('bhwf,fc->bhwc', g.astype(matmul_dtype), w2.astype(matmul_dtype),
                     preferred_element_type=jnp.float32) + b2.reshape(1, 1, 1, C)
    return out


def init_params(key, dim, ffn_expansion_factor):
    hidden = int(dim * ffn_expansion_factor)
    F2 = hidden * 2
    ks = jax.random.split(key, 6)
    w1 = jax.random.normal(ks[0], (dim, F2), jnp.float32) * 0.1
    b1 = jax.random.normal(ks[1], (1, F2), jnp.float32) * 0.1
    wd = jax.random.normal(ks[2], (3, 3, F2), jnp.float32) * 0.1
    bd = jax.random.normal(ks[3], (1, F2), jnp.float32) * 0.1
    w2 = jax.random.normal(ks[4], (hidden, dim), jnp.float32) * 0.1
    b2 = jax.random.normal(ks[5], (1, dim), jnp.float32) * 0.1
    return (w1, b1, wd, bd, w2, b2)


if __name__ == "__main__":
    # Small shapes: B=2, dim=8, H=W=16, ffn_expansion_factor=2 -> hidden=16, F2=32.
    key = jax.random.PRNGKey(0)
    kx, kp = jax.random.split(key)
    B, H, W, dim = 2, 16, 16, 8
    x = jax.random.normal(kx, (B, H, W, dim), jnp.float32)  # NHWC
    params = init_params(kp, dim, ffn_expansion_factor=2)

    # force 2 row-tiles so the inter-tile halo path is exercised
    out = feedforward_pallas(x, params, tile_h=8)
    out = jax.block_until_ready(out)
    assert out.shape == (B, H, W, dim)

    # tight check vs a reference with matching bf16 matmul operands / tanh GELU
    ref_matched = feedforward_reference(x, params, matmul_dtype=jnp.bfloat16,
                                        approximate_gelu=True)
    assert jnp.allclose(out, ref_matched, atol=1e-3, rtol=1e-3), \
        "mismatch vs matched reference"

    # loose check vs the pure-f32 exact-erf reference (tolerance covers bf16 matmul
    # operands + tanh-approx GELU)
    ref_f32 = feedforward_reference(x, params)
    assert jnp.allclose(out, ref_f32, atol=5e-2, rtol=5e-2), "mismatch vs f32 reference"

    # auto tile selection path (single tile at this size)
    out2 = jax.block_until_ready(feedforward_pallas(x, params))
    assert jnp.allclose(out2, ref_matched, atol=1e-3, rtol=1e-3), "mismatch (auto tile)"

    print("KERNEL_OK")
</pallas_src>

<mosaic_0001>
module attributes {stable_mosaic.version = 11 : i64} {
  func.func @_ffn_kernel(%arg0: i32, %arg1: i32, %arg2: memref<1x8x16x8xbf16, #tpu.memory_space<vmem>>, %arg3: memref<1x1x16x8xbf16, #tpu.memory_space<vmem>>, %arg4: memref<1x1x16x8xbf16, #tpu.memory_space<vmem>>, %arg5: memref<8x256xbf16, #tpu.memory_space<vmem>>, %arg6: memref<1x256xf32, #tpu.memory_space<vmem>>, %arg7: memref<9x256xf32, #tpu.memory_space<vmem>>, %arg8: memref<1x256xf32, #tpu.memory_space<vmem>>, %arg9: memref<128x128xbf16, #tpu.memory_space<vmem>>, %arg10: memref<1x128xf32, #tpu.memory_space<vmem>>, %arg11: memref<1x128x128xf32, #tpu.memory_space<vmem>>) attributes {dimension_semantics = [#tpu.dimension_semantics<parallel>, #tpu.dimension_semantics<parallel>], iteration_bounds = array<i64: 2, 2>, scalar_prefetch = 0 : i64, scratch_operands = 0 : i64, tpu.core_type = #tpu.core_type<tc>, window_params = [{transform_indices = @transform_0, window_bounds = array<i64: 1, 8, 16, 8>}, {transform_indices = @transform_1, window_bounds = array<i64: 1, 1, 16, 8>}, {transform_indices = @transform_2, window_bounds = array<i64: 1, 1, 16, 8>}, {pipeline_mode = #tpu.pipeline_mode<synchronous>, transform_indices = @transform_3, window_bounds = array<i64: 8, 256>}, {pipeline_mode = #tpu.pipeline_mode<synchronous>, transform_indices = @transform_4, window_bounds = array<i64: 1, 256>}, {pipeline_mode = #tpu.pipeline_mode<synchronous>, transform_indices = @transform_5, window_bounds = array<i64: 9, 256>}, {pipeline_mode = #tpu.pipeline_mode<synchronous>, transform_indices = @transform_6, window_bounds = array<i64: 1, 256>}, {pipeline_mode = #tpu.pipeline_mode<synchronous>, transform_indices = @transform_7, window_bounds = array<i64: 128, 128>}, {pipeline_mode = #tpu.pipeline_mode<synchronous>, transform_indices = @transform_8, window_bounds = array<i64: 1, 128>}, {transform_indices = @transform_9, window_bounds = array<i64: 1, 128, 128>}]} {
    %c0 = arith.constant 0 : index
    %c0_0 = arith.constant 0 : index
    %c0_1 = arith.constant 0 : index
    %c0_2 = arith.constant 0 : index
    %0 = vector.load %arg3[%c0, %c0_0, %c0_1, %c0_2] : memref<1x1x16x8xbf16, #tpu.memory_space<vmem>>, vector<1x1x16x8xbf16>
    %1 = vector.shape_cast %0 : vector<1x1x16x8xbf16> to vector<1x16x8xbf16>
    %c0_3 = arith.constant 0 : index
    %c0_4 = arith.constant 0 : index
    %c0_5 = arith.constant 0 : index
    %c0_6 = arith.constant 0 : index
    %2 = vector.load %arg2[%c0_3, %c0_4, %c0_5, %c0_6] : memref<1x8x16x8xbf16, #tpu.memory_space<vmem>>, vector<1x8x16x8xbf16>
    %3 = vector.shape_cast %2 : vector<1x8x16x8xbf16> to vector<8x16x8xbf16>
    %c0_7 = arith.constant 0 : index
    %c0_8 = arith.constant 0 : index
    %c0_9 = arith.constant 0 : index
    %c0_10 = arith.constant 0 : index
    %4 = vector.load %arg4[%c0_7, %c0_8, %c0_9, %c0_10] : memref<1x1x16x8xbf16, #tpu.memory_space<vmem>>, vector<1x1x16x8xbf16>
    %5 = vector.shape_cast %4 : vector<1x1x16x8xbf16> to vector<1x16x8xbf16>
    %6 = tpu.concatenate %1, %3, %5 in 0 : vector<1x16x8xbf16>, vector<8x16x8xbf16>, vector<1x16x8xbf16> -> vector<10x16x8xbf16>
    %7 = vector.shape_cast %6 : vector<10x16x8xbf16> to vector<160x8xbf16>
    %c0_11 = arith.constant 0 : index
    %c0_12 = arith.constant 0 : index
    %8 = vector.load %arg5[%c0_11, %c0_12] : memref<8x256xbf16, #tpu.memory_space<vmem>>, vector<8x256xbf16>
    %cst = arith.constant dense<0.000000e+00> : vector<160x256xf32>
    %9 = tpu.matmul %7, %8, %cst {dimension_numbers = #tpu.dot_dimension_numbers<[1], [0], [0], [1], [0, 0, 1, 1], [], []>} : vector<160x8xbf16>, vector<8x256xbf16>, vector<160x256xf32> -> vector<160x256xf32>
    %c0_13 = arith.constant 0 : index
    %c0_14 = arith.constant 0 : index
    %10 = vector.load %arg6[%c0_13, %c0_14] : memref<1x256xf32, #tpu.memory_space<vmem>>, vector<1x256xf32>
    %11 = vector.broadcast %10 : vector<1x256xf32> to vector<160x256xf32>
    %12 = arith.addf %9, %11 : vector<160x256xf32>
    %13 = vector.shape_cast %12 : vector<160x256xf32> to vector<10x16x256xf32>
    %14 = tpu.iota {dimensions = array<i32: 0>} : vector<10x16x1xi32>
    %c0_i32 = arith.constant 0 : i32
    %15 = vector.broadcast %c0_i32 : i32 to vector<10x16x1xi32>
    %16 = arith.cmpi eq, %14, %15 : vector<10x16x1xi32>
    %c0_i32_15 = arith.constant 0 : i32
    %17 = arith.cmpi eq, %arg1, %c0_i32_15 : i32
    %18 = vector.broadcast %17 : i1 to vector<10x16x1xi1>
    %19 = arith.andi %16, %18 : vector<10x16x1xi1>
    %c9_i32 = arith.constant 9 : i32
    %20 = vector.broadcast %c9_i32 : i32 to vector<10x16x1xi32>
    %21 = arith.cmpi eq, %14, %20 : vector<10x16x1xi32>
    %c1_i32 = arith.constant 1 : i32
    %22 = arith.cmpi eq, %arg1, %c1_i32 : i32
    %23 = vector.broadcast %22 : i1 to vector<10x16x1xi1>
    %24 = arith.andi %21, %23 : vector<10x16x1xi1>
    %25 = arith.ori %19, %24 : vector<10x16x1xi1>
    %cst_16 = arith.constant 0.000000e+00 : f32
    %26 = vector.shape_cast %25 : vector<10x16x1xi1> to vector<10x16x1xi1>
    %27 = vector.broadcast %26 : vector<10x16x1xi1> to vector<10x16x256xi1>
    %28 = vector.broadcast %cst_16 : f32 to vector<10x16x256xf32>
    %29 = arith.select %27, %28, %13 : vector<10x16x256xi1>, vector<10x16x256xf32>
    %c0_17 = arith.constant 0 : index
    %c0_18 = arith.constant 0 : index
    %30 = vector.load %arg7[%c0_17, %c0_18] : memref<9x256xf32, #tpu.memory_space<vmem>>, vector<9x256xf32>
    %31 = vector.extract_strided_slice %29 {offsets = [1, 0, 0], sizes = [8, 16, 256], strides = [1, 1, 1]} : vector<10x16x256xf32> to vector<8x16x256xf32>
    %32 = vector.extract_strided_slice %30 {offsets = [4, 0], sizes = [1, 256], strides = [1, 1]} : vector<9x256xf32> to vector<1x256xf32>
    %33 = vector.shape_cast %32 : vector<1x256xf32> to vector<256xf32>
    %34 = vector.shape_cast %33 : vector<256xf32> to vector<1x1x256xf32>
    %35 = vector.broadcast %34 : vector<1x1x256xf32> to vector<8x16x256xf32>
    %36 = arith.mulf %31, %35 : vector<8x16x256xf32>
    %37 = vector.extract_strided_slice %29 {offsets = [0, 0, 0], sizes = [8, 16, 256], strides = [1, 1, 1]} : vector<10x16x256xf32> to vector<8x16x256xf32>
    %38 = vector.extract_strided_slice %30 {offsets = [1, 0], sizes = [1, 256], strides = [1, 1]} : vector<9x256xf32> to vector<1x256xf32>
    %39 = vector.shape_cast %38 : vector<1x256xf32> to vector<256xf32>
    %40 = vector.shape_cast %39 : vector<256xf32> to vector<1x1x256xf32>
    %41 = vector.broadcast %40 : vector<1x1x256xf32> to vector<8x16x256xf32>
    %42 = arith.mulf %37, %41 : vector<8x16x256xf32>
    %43 = arith.addf %36, %42 : vector<8x16x256xf32>
    %44 = vector.extract_strided_slice %29 {offsets = [2, 0, 0], sizes = [8, 16, 256], strides = [1, 1, 1]} : vector<10x16x256xf32> to vector<8x16x256xf32>
    %45 = vector.extract_strided_slice %30 {offsets = [7, 0], sizes = [1, 256], strides = [1, 1]} : vector<9x256xf32> to vector<1x256xf32>
    %46 = vector.shape_cast %45 : vector<1x256xf32> to vector<256xf32>
    %47 = vector.shape_cast %46 : vector<256xf32> to vector<1x1x256xf32>
    %48 = vector.broadcast %47 : vector<1x1x256xf32> to vector<8x16x256xf32>
    %49 = arith.mulf %44, %48 : vector<8x16x256xf32>
    %50 = arith.addf %43, %49 : vector<8x16x256xf32>
    %51 = vector.extract_strided_slice %29 {offsets = [0, 0, 0], sizes = [8, 16, 256], strides = [1, 1, 1]} : vector<10x16x256xf32> to vector<8x16x256xf32>
    %52 = vector.extract_strided_slice %30 {offsets = [0, 0], sizes = [1, 256], strides = [1, 1]} : vector<9x256xf32> to vector<1x256xf32>
    %53 = vector.shape_cast %52 : vector<1x256xf32> to vector<256xf32>
    %54 = vector.shape_cast %53 : vector<256xf32> to vector<1x1x256xf32>
    %55 = vector.broadcast %54 : vector<1x1x256xf32> to vector<8x16x256xf32>
    %56 = arith.mulf %51, %55 : vector<8x16x256xf32>
    %57 = vector.extract_strided_slice %29 {offsets = [1, 0, 0], sizes = [8, 16, 256], strides = [1, 1, 1]} : vector<10x16x256xf32> to vector<8x16x256xf32>
    %58 = vector.extract_strided_slice %30 {offsets = [3, 0], sizes = [1, 256], strides = [1, 1]} : vector<9x256xf32> to vector<1x256xf32>
    %59 = vector.shape_cast %58 : vector<1x256xf32> to vector<256xf32>
    %60 = vector.shape_cast %59 : vector<256xf32> to vector<1x1x256xf32>
    %61 = vector.broadcast %60 : vector<1x1x256xf32> to vector<8x16x256xf32>
    %62 = arith.mulf %57, %61 : vector<8x16x256xf32>
    %63 = arith.addf %56, %62 : vector<8x16x256xf32>
    %64 = vector.extract_strided_slice %29 {offsets = [2, 0, 0], sizes = [8, 16, 256], strides = [1, 1, 1]} : vector<10x16x256xf32> to vector<8x16x256xf32>
    %65 = vector.extract_strided_slice %30 {offsets = [6, 0], sizes = [1, 256], strides = [1, 1]} : vector<9x256xf32> to vector<1x256xf32>
    %66 = vector.shape_cast %65 : vector<1x256xf32> to vector<256xf32>
    %67 = vector.shape_cast %66 : vector<256xf32> to vector<1x1x256xf32>
    %68 = vector.broadcast %67 : vector<1x1x256xf32> to vector<8x16x256xf32>
    %69 = arith.mulf %64, %68 : vector<8x16x256xf32>
    %70 = arith.addf %63, %69 : vector<8x16x256xf32>
    %71 = vector.extract_strided_slice %29 {offsets = [0, 0, 0], sizes = [8, 16, 256], strides = [1, 1, 1]} : vector<10x16x256xf32> to vector<8x16x256xf32>
    %72 = vector.extract_strided_slice %30 {offsets = [2, 0], sizes = [1, 256], strides = [1, 1]} : vector<9x256xf32> to vector<1x256xf32>
    %73 = vector.shape_cast %72 : vector<1x256xf32> to vector<256xf32>
    %74 = vector.shape_cast %73 : vector<256xf32> to vector<1x1x256xf32>
    %75 = vector.broadcast %74 : vector<1x1x256xf32> to vector<8x16x256xf32>
    %76 = arith.mulf %71, %75 : vector<8x16x256xf32>
    %77 = vector.extract_strided_slice %29 {offsets = [1, 0, 0], sizes = [8, 16, 256], strides = [1, 1, 1]} : vector<10x16x256xf32> to vector<8x16x256xf32>
    %78 = vector.extract_strided_slice %30 {offsets = [5, 0], sizes = [1, 256], strides = [1, 1]} : vector<9x256xf32> to vector<1x256xf32>
    %79 = vector.shape_cast %78 : vector<1x256xf32> to vector<256xf32>
    %80 = vector.shape_cast %79 : vector<256xf32> to vector<1x1x256xf32>
    %81 = vector.broadcast %80 : vector<1x1x256xf32> to vector<8x16x256xf32>
    %82 = arith.mulf %77, %81 : vector<8x16x256xf32>
    %83 = arith.addf %76, %82 : vector<8x16x256xf32>
    %84 = vector.extract_strided_slice %29 {offsets = [2, 0, 0], sizes = [8, 16, 256], strides = [1, 1, 1]} : vector<10x16x256xf32> to vector<8x16x256xf32>
    %85 = vector.extract_strided_slice %30 {offsets = [8, 0], sizes = [1, 256], strides = [1, 1]} : vector<9x256xf32> to vector<1x256xf32>
    %86 = vector.shape_cast %85 : vector<1x256xf32> to vector<256xf32>
    %87 = vector.shape_cast %86 : vector<256xf32> to vector<1x1x256xf32>
    %88 = vector.broadcast %87 : vector<1x1x256xf32> to vector<8x16x256xf32>
    %89 = arith.mulf %84, %88 : vector<8x16x256xf32>
    %90 = arith.addf %83, %89 : vector<8x16x256xf32>
    %cst_19 = arith.constant 0.000000e+00 : f32
    %91 = vector.broadcast %cst_19 : f32 to vector<8x1x256xf32>
    %92 = vector.extract_strided_slice %70 {offsets = [0, 0, 0], sizes = [8, 15, 256], strides = [1, 1, 1]} : vector<8x16x256xf32> to vector<8x15x256xf32>
    %93 = tpu.concatenate %91, %92 in 1 : vector<8x1x256xf32>, vector<8x15x256xf32> -> vector<8x16x256xf32>
    %94 = arith.addf %50, %93 : vector<8x16x256xf32>
    %95 = vector.extract_strided_slice %90 {offsets = [0, 1, 0], sizes = [8, 15, 256], strides = [1, 1, 1]} : vector<8x16x256xf32> to vector<8x15x256xf32>
    %96 = tpu.concatenate %95, %91 in 1 : vector<8x15x256xf32>, vector<8x1x256xf32> -> vector<8x16x256xf32>
    %97 = arith.addf %94, %96 : vector<8x16x256xf32>
    %c0_20 = arith.constant 0 : index
    %c0_21 = arith.constant 0 : index
    %98 = vector.load %arg8[%c0_20, %c0_21] : memref<1x256xf32, #tpu.memory_space<vmem>>, vector<1x256xf32>
    %99 = vector.shape_cast %98 : vector<1x256xf32> to vector<1x1x256xf32>
    %100 = vector.broadcast %99 : vector<1x1x256xf32> to vector<8x16x256xf32>
    %101 = arith.addf %97, %100 : vector<8x16x256xf32>
    %102 = vector.extract_strided_slice %101 {offsets = [0, 0, 0], sizes = [8, 16, 128], strides = [1, 1, 1]} : vector<8x16x256xf32> to vector<8x16x128xf32>
    %103 = vector.extract_strided_slice %101 {offsets = [0, 0, 128], sizes = [8, 16, 128], strides = [1, 1, 1]} : vector<8x16x256xf32> to vector<8x16x128xf32>
    %104 = arith.mulf %102, %102 : vector<8x16x128xf32>
    %105 = arith.mulf %102, %104 : vector<8x16x128xf32>
    %cst_22 = arith.constant 4.471500e-02 : f32
    %106 = vector.broadcast %cst_22 : f32 to vector<8x16x128xf32>
    %107 = arith.mulf %106, %105 : vector<8x16x128xf32>
    %108 = arith.addf %102, %107 : vector<8x16x128xf32>
    %cst_23 = arith.constant 0.797884583 : f32
    %109 = vector.broadcast %cst_23 : f32 to vector<8x16x128xf32>
    %110 = arith.mulf %109, %108 : vector<8x16x128xf32>
    %111 = math.tanh %110 : vector<8x16x128xf32>
    %cst_24 = arith.constant 1.000000e+00 : f32
    %112 = vector.broadcast %cst_24 : f32 to vector<8x16x128xf32>
    %113 = arith.addf %112, %111 : vector<8x16x128xf32>
    %cst_25 = arith.constant 5.000000e-01 : f32
    %114 = vector.broadcast %cst_25 : f32 to vector<8x16x128xf32>
    %115 = arith.mulf %114, %113 : vector<8x16x128xf32>
    %116 = arith.mulf %102, %115 : vector<8x16x128xf32>
    %117 = arith.mulf %116, %103 : vector<8x16x128xf32>
    %118 = vector.shape_cast %117 : vector<8x16x128xf32> to vector<128x128xf32>
    %119 = arith.truncf %118 : vector<128x128xf32> to vector<128x128xbf16>
    %c0_26 = arith.constant 0 : index
    %c0_27 = arith.constant 0 : index
    %120 = vector.load %arg9[%c0_26, %c0_27] : memref<128x128xbf16, #tpu.memory_space<vmem>>, vector<128x128xbf16>
    %cst_28 = arith.constant dense<0.000000e+00> : vector<128x128xf32>
    %121 = tpu.matmul %119, %120, %cst_28 {dimension_numbers = #tpu.dot_dimension_numbers<[1], [0], [0], [1], [0, 0, 1, 1], [], []>} : vector<128x128xbf16>, vector<128x128xbf16>, vector<128x128xf32> -> vector<128x128xf32>
    %c0_29 = arith.constant 0 : index
    %c0_30 = arith.constant 0 : index
    %122 = vector.load %arg10[%c0_29, %c0_30] : memref<1x128xf32, #tpu.memory_space<vmem>>, vector<1x128xf32>
    %123 = vector.broadcast %122 : vector<1x128xf32> to vector<128x128xf32>
    %124 = arith.addf %121, %123 : vector<128x128xf32>
    %125 = vector.shape_cast %124 : vector<128x128xf32> to vector<1x128x128xf32>
    %c0_31 = arith.constant 0 : index
    %c0_32 = arith.constant 0 : index
    %c0_33 = arith.constant 0 : index
    %126 = vector.load %arg11[%c0_31, %c0_32, %c0_33] : memref<1x128x128xf32, #tpu.memory_space<vmem>>, vector<1x128x128xf32>
    tpu.vector_store %arg11[%c0_31, %c0_32, %c0_33], %125 {strides = array<i32>} : memref<1x128x128xf32, #tpu.memory_space<vmem>>, vector<1x128x128xf32>,
    return
  }
  func.func @transform_0(%arg0: i32, %arg1: i32) -> (i32, i32, i32, i32) {
    %c0_i32 = arith.constant 0 : i32
    %c0_i32_0 = arith.constant 0 : i32
    %c0_i32_1 = arith.constant 0 : i32
    return %arg0, %arg1, %c0_i32, %c0_i32_0 : i32, i32, i32, i32
  }
  func.func @transform_1(%arg0: i32, %arg1: i32) -> (i32, i32, i32, i32) {
    %c8_i32 = arith.constant 8 : i32
    %0 = arith.muli %arg1, %c8_i32 : i32
    %c1_i32 = arith.constant 1 : i32
    %1 = arith.subi %0, %c1_i32 : i32
    %c0_i32 = arith.constant 0 : i32
    %2 = arith.maxsi %1, %c0_i32 : i32
    %c0_i32_0 = arith.constant 0 : i32
    %c0_i32_1 = arith.constant 0 : i32
    %c0_i32_2 = arith.constant 0 : i32
    return %arg0, %2, %c0_i32_0, %c0_i32_1 : i32, i32, i32, i32
  }
  func.func @transform_2(%arg0: i32, %arg1: i32) -> (i32, i32, i32, i32) {
    %c8_i32 = arith.constant 8 : i32
    %0 = arith.muli %arg1, %c8_i32 : i32
    %c8_i32_0 = arith.constant 8 : i32
    %1 = arith.addi %0, %c8_i32_0 : i32
    %c15_i32 = arith.constant 15 : i32
    %2 = arith.minsi %1, %c15_i32 : i32
    %c0_i32 = arith.constant 0 : i32
    %c0_i32_1 = arith.constant 0 : i32
    %c0_i32_2 = arith.constant 0 : i32
    return %arg0, %2, %c0_i32, %c0_i32_1 : i32, i32, i32, i32
  }
  func.func @transform_3(%arg0: i32, %arg1: i32) -> (i32, i32) {
    %c0_i32 = arith.constant 0 : i32
    %c0_i32_0 = arith.constant 0 : i32
    %c0_i32_1 = arith.constant 0 : i32
    return %c0_i32, %c0_i32_0 : i32, i32
  }
  func.func @transform_4(%arg0: i32, %arg1: i32) -> (i32, i32) {
    %c0_i32 = arith.constant 0 : i32
    %c0_i32_0 = arith.constant 0 : i32
    %c0_i32_1 = arith.constant 0 : i32
    return %c0_i32, %c0_i32_0 : i32, i32
  }
  func.func @transform_5(%arg0: i32, %arg1: i32) -> (i32, i32) {
    %c0_i32 = arith.constant 0 : i32
    %c0_i32_0 = arith.constant 0 : i32
    %c0_i32_1 = arith.constant 0 : i32
    return %c0_i32, %c0_i32_0 : i32, i32
  }
  func.func @transform_6(%arg0: i32, %arg1: i32) -> (i32, i32) {
    %c0_i32 = arith.constant 0 : i32
    %c0_i32_0 = arith.constant 0 : i32
    %c0_i32_1 = arith.constant 0 : i32
    return %c0_i32, %c0_i32_0 : i32, i32
  }
  func.func @transform_7(%arg0: i32, %arg1: i32) -> (i32, i32) {
    %c0_i32 = arith.constant 0 : i32
    %c0_i32_0 = arith.constant 0 : i32
    %c0_i32_1 = arith.constant 0 : i32
    return %c0_i32, %c0_i32_0 : i32, i32
  }
  func.func @transform_8(%arg0: i32, %arg1: i32) -> (i32, i32) {
    %c0_i32 = arith.constant 0 : i32
    %c0_i32_0 = arith.constant 0 : i32
    %c0_i32_1 = arith.constant 0 : i32
    return %c0_i32, %c0_i32_0 : i32, i32
  }
  func.func @transform_9(%arg0: i32, %arg1: i32) -> (i32, i32, i32) {
    %c0_i32 = arith.constant 0 : i32
    %c0_i32_0 = arith.constant 0 : i32
    return %arg0, %arg1, %c0_i32 : i32, i32, i32
  }
}

</mosaic_0001>

<llo_original>
// kernel: tpu_custom_call.1
$region0: #{tpu_custom_call.1}
  #allocation0 [shape = 'u32[]', space=smem, size = 0x4, offset = 0x4, fixed_abs, tag = 'smem constant byte address 0x4 - core index']
  #allocation1 [shape = 'u32[144,128]{1,0:T(1,128)}', space=vmem, size = 0x12000, scoped, tag = 'internal scratch']
  %s0 = inlined_call_operand.vmem [shape: bf16[2,16,16,8], index: 0, kind: input, shape index: {}]
  %s1 = inlined_call_operand.vmem [shape: bf16[2,16,16,8], index: 1, kind: input, shape index: {}]
  %s2 = inlined_call_operand.vmem [shape: bf16[2,16,16,8], index: 2, kind: input, shape index: {}]
  %s3 = inlined_call_operand.vmem [shape: bf16[8,256], index: 3, kind: input, shape index: {}]
  %s4 = inlined_call_operand.vmem [shape: f32[1,256], index: 4, kind: input, shape index: {}]
  %s5 = inlined_call_operand.vmem [shape: f32[9,256], index: 5, kind: input, shape index: {}]
  %s6 = inlined_call_operand.vmem [shape: f32[1,256], index: 6, kind: input, shape index: {}]
  %s7 = inlined_call_operand.vmem [shape: bf16[128,128], index: 7, kind: input, shape index: {}]
  %s8 = inlined_call_operand.vmem [shape: f32[1,128], index: 8, kind: input, shape index: {}]
  %s9 = inlined_call_operand.hbm [shape: f32[2,256,128], index: 9, kind: output, shape index: {}]
  %s10 = sld [smem:[#allocation0]]
  $region69: #{tpu_custom_call.1} parent=0
    _
  %s12 = ssub.s32 1, %s10
  %s13 = scalar_select 0, %s12, %s10
  $region1: #{tpu_custom_call.1} parent=0
    #allocation2 [shape = 'u8[131072]{0}', space=vmem, size = 0x20000, scoped, tag = 'output window, operand 0']
    #allocation3 [shape = 's32[2]{0}', space=sflag, size = 0x8, scoped, tag = 'scoped memory for tpu_custom_call.1']
    %14 = vsyncpa [#allocation3], 0
    %s15 = scalar_lea.sflag [#allocation3], 1
    %16 = vsyncpa %s15, 0
    loop: start=0, step=1, limit=6
    $region2: #{tpu_custom_call.1} parent=1 // loop_pre_header
      _
    $region3: #{tpu_custom_call.1} parent=1 // loop_header
      %s18 = sphi 0, %s22
      %p19 = scmp.ge.s32.totalorder %s18, 6
      %s25 = sphi 0, %s37
      %s26 = sphi 0, %s33
      %s27 = sphi 0, %s25
      %s28 = sphi 0, %s26
      %s29 = sphi 0, %s27
      %s30 = sphi 0, %s28
      %s42 = sphi 0, %s44
      %s45 = sphi 0, %s42
      %s46 = sphi 0, %s45
      %s62 = sphi 0, %s46
      %s78 = sphi 0, %s80
      %s81 = sphi 0, %s78
      %s82 = sphi 0, %s81
      %s98 = sphi 0, %s82
      %s114 = sphi 0, %s116
      %s117 = sphi 0, %s114
      %s118 = sphi 0, %s117
      %s134 = sphi 0, %s118
      %s138 = sphi 0, %s138
      %s140 = sphi 0, %s138
      %s141 = sphi 0, %s140
      %s155 = sphi 0, %s141
      %s159 = sphi 0, %s159
      %s161 = sphi 0, %s159
      %s162 = sphi 0, %s161
      %s176 = sphi 0, %s162
      %s180 = sphi 0, %s180
      %s182 = sphi 0, %s180
      %s183 = sphi 0, %s182
      %s197 = sphi 0, %s183
      %s201 = sphi 0, %s201
      %s203 = sphi 0, %s201
      %s204 = sphi 0, %s203
      %s218 = sphi 0, %s204
      %s222 = sphi 0, %s222
      %s224 = sphi 0, %s222
      %s225 = sphi 0, %s224
      %s239 = sphi 0, %s225
      %s243 = sphi 0, %s243
      %s245 = sphi 0, %s243
      %s246 = sphi 0, %s245
      %s260 = sphi 0, %s246
      %s268 = sphi 0, %s270
      %s271 = sphi 0, %s268
      %s272 = sphi 0, %s271
      %s288 = sphi 0, %s272
    $region4: #{tpu_custom_call.1} parent=1 // loop_header_branch
      %21 = sbr.rel (%p19) target = $region8
    $region5: #{tpu_custom_call.1} parent=1 // loop_body
      %s23 = ssub.s32 %s18, 1
      %s24 = ssub.s32 %s18, 2
      %s31 = sadd.s32 1, %s26
      %p32 = scmp.ge.s32.totalorder %s31, 2
      %s33 = scalar_select %p32, 0, %s31
      %s34 = sadd.s32 1, %s25
      %s35 = scalar_select %p32, %s34, %s25
      %p36 = scmp.ge.s32.totalorder %s35, 2
      %s37 = scalar_select %p36, 0, %s35
      %s38 = ssub.s32 %s25, %s37
      %s39 = ssub.s32 %s26, %s33
      %s40 = sor.u32 %s38, %s39
      %p41 = scmp.eq.s32.totalorder %s40, 0
      %s43 = sadd.s32 %s42, 1
      %s44 = scalar_select %p41, %s42, %s43
      %p47 = pneg %p41
      %p48 = scmp.eq.s32.totalorder %s18, 3
      %p49 = por %p47, %p48
      %p50 = scmp.ne.s32.totalorder %s42, %s45
      %p51 = scmp.eq.s32.totalorder %s18, 0
      %p52 = por %p50, %p51
      %p53 = scmp.ne.s32.totalorder %s42, %s45
      %p54 = scmp.eq.s32.totalorder %s23, 3
      %p55 = por %p53, %p54
      %p56 = scmp.ne.s32.totalorder %s45, %s46
      %p57 = scmp.eq.s32.totalorder %s23, 0
      %p58 = por %p56, %p57
      %p59 = scmp.ne.s32.totalorder %s45, %s46
      %p60 = scmp.eq.s32.totalorder %s24, 3
      %p61 = por %p59, %p60
      %p63 = scmp.ne.s32.totalorder %s46, %s62
      %p64 = scmp.eq.s32.totalorder %s24, 0
      %p65 = por %p63, %p64
      %s66 = smul.u32 %s26, 8
      %s67 = ssub.s32 %s66, 1
      %p68 = scmp.gt.s32.totalorder %s67, 0
      %s69 = scalar_select %p68, %s67, 0
      %s70 = smul.u32 %s33, 8
      %s71 = ssub.s32 %s70, 1
      %p72 = scmp.gt.s32.totalorder %s71, 0
      %s73 = scalar_select %p72, %s71, 0
      %s74 = ssub.s32 %s25, %s37
      %s75 = ssub.s32 %s69, %s73
      %s76 = sor.u32 %s74, %s75
      %p77 = scmp.eq.s32.totalorder %s76, 0
      %s79 = sadd.s32 %s78, 1
      %s80 = scalar_select %p77, %s78, %s79
      %p83 = pneg %p77
      %p84 = scmp.eq.s32.totalorder %s18, 3
      %p85 = por %p83, %p84
      %p86 = scmp.ne.s32.totalorder %s78, %s81
      %p87 = scmp.eq.s32.totalorder %s18, 0
      %p88 = por %p86, %p87
      %p89 = scmp.ne.s32.totalorder %s78, %s81
      %p90 = scmp.eq.s32.totalorder %s23, 3
      %p91 = por %p89, %p90
      %p92 = scmp.ne.s32.totalorder %s81, %s82
      %p93 = scmp.eq.s32.totalorder %s23, 0
      %p94 = por %p92, %p93
      %p95 = scmp.ne.s32.totalorder %s81, %s82
      %p96 = scmp.eq.s32.totalorder %s24, 3
      %p97 = por %p95, %p96
      %p99 = scmp.ne.s32.totalorder %s82, %s98
      %p100 = scmp.eq.s32.totalorder %s24, 0
      %p101 = por %p99, %p100
      %s102 = smul.u32 %s26, 8
      %s103 = sadd.s32 %s102, 8
      %p104 = scmp.lt.s32.totalorder %s103, 15
      %s105 = scalar_select %p104, %s103, 15
      %s106 = smul.u32 %s33, 8
      %s107 = sadd.s32 %s106, 8
      %p108 = scmp.lt.s32.totalorder %s107, 15
      %s109 = scalar_select %p108, %s107, 15
      %s110 = ssub.s32 %s25, %s37
      %s111 = ssub.s32 %s105, %s109
      %s112 = sor.u32 %s110, %s111
      %p113 = scmp.eq.s32.totalorder %s112, 0
      %s115 = sadd.s32 %s114, 1
      %s116 = scalar_select %p113, %s114, %s115
      %p119 = pneg %p113
      %p120 = scmp.eq.s32.totalorder %s18, 3
      %p121 = por %p119, %p120
      %p122 = scmp.ne.s32.totalorder %s114, %s117
      %p123 = scmp.eq.s32.totalorder %s18, 0
      %p124 = por %p122, %p123
      %p125 = scmp.ne.s32.totalorder %s114, %s117
      %p126 = scmp.eq.s32.totalorder %s23, 3
      %p127 = por %p125, %p126
      %p128 = scmp.ne.s32.totalorder %s117, %s118
      %p129 = scmp.eq.s32.totalorder %s23, 0
      %p130 = por %p128, %p129
      %p131 = scmp.ne.s32.totalorder %s117, %s118
      %p132 = scmp.eq.s32.totalorder %s24, 3
      %p133 = por %p131, %p132
      %p135 = scmp.ne.s32.totalorder %s118, %s134
      %p136 = scmp.eq.s32.totalorder %s24, 0
      %p137 = por %p135, %p136
      %s139 = sadd.s32 %s138, 1
      %p142 = scmp.eq.s32.totalorder %s18, 3
      %p143 = scmp.ne.s32.totalorder %s138, %s140
      %p144 = scmp.eq.s32.totalorder %s18, 0
      %p145 = por %p143, %p144
      %p146 = scmp.ne.s32.totalorder %s138, %s140
      %p147 = scmp.eq.s32.totalorder %s23, 3
      %p148 = por %p146, %p147
      %p149 = scmp.ne.s32.totalorder %s140, %s141
      %p150 = scmp.eq.s32.totalorder %s23, 0
      %p151 = por %p149, %p150
      %p152 = scmp.ne.s32.totalorder %s140, %s141
      %p153 = scmp.eq.s32.totalorder %s24, 3
      %p154 = por %p152, %p153
      %p156 = scmp.ne.s32.totalorder %s141, %s155
      %p157 = scmp.eq.s32.totalorder %s24, 0
      %p158 = por %p156, %p157
      %s160 = sadd.s32 %s159, 1
      %p163 = scmp.eq.s32.totalorder %s18, 3
      %p164 = scmp.ne.s32.totalorder %s159, %s161
      %p165 = scmp.eq.s32.totalorder %s18, 0
      %p166 = por %p164, %p165
      %p167 = scmp.ne.s32.totalorder %s159, %s161
      %p168 = scmp.eq.s32.totalorder %s23, 3
      %p169 = por %p167, %p168
      %p170 = scmp.ne.s32.totalorder %s161, %s162
      %p171 = scmp.eq.s32.totalorder %s23, 0
      %p172 = por %p170, %p171
      %p173 = scmp.ne.s32.totalorder %s161, %s162
      %p174 = scmp.eq.s32.totalorder %s24, 3
      %p175 = por %p173, %p174
      %p177 = scmp.ne.s32.totalorder %s162, %s176
      %p178 = scmp.eq.s32.totalorder %s24, 0
      %p179 = por %p177, %p178
      %s181 = sadd.s32 %s180, 1
      %p184 = scmp.eq.s32.totalorder %s18, 3
      %p185 = scmp.ne.s32.totalorder %s180, %s182
      %p186 = scmp.eq.s32.totalorder %s18, 0
      %p187 = por %p185, %p186
      %p188 = scmp.ne.s32.totalorder %s180, %s182
      %p189 = scmp.eq.s32.totalorder %s23, 3
      %p190 = por %p188, %p189
      %p191 = scmp.ne.s32.totalorder %s182, %s183
      %p192 = scmp.eq.s32.totalorder %s23, 0
      %p193 = por %p191, %p192
      %p194 = scmp.ne.s32.totalorder %s182, %s183
      %p195 = scmp.eq.s32.totalorder %s24, 3
      %p196 = por %p194, %p195
      %p198 = scmp.ne.s32.totalorder %s183, %s197
      %p199 = scmp.eq.s32.totalorder %s24, 0
      %p200 = por %p198, %p199
      %s202 = sadd.s32 %s201, 1
      %p205 = scmp.eq.s32.totalorder %s18, 3
      %p206 = scmp.ne.s32.totalorder %s201, %s203
      %p207 = scmp.eq.s32.totalorder %s18, 0
      %p208 = por %p206, %p207
      %p209 = scmp.ne.s32.totalorder %s201, %s203
      %p210 = scmp.eq.s32.totalorder %s23, 3
      %p211 = por %p209, %p210
      %p212 = scmp.ne.s32.totalorder %s203, %s204
      %p213 = scmp.eq.s32.totalorder %s23, 0
      %p214 = por %p212, %p213
      %p215 = scmp.ne.s32.totalorder %s203, %s204
      %p216 = scmp.eq.s32.totalorder %s24, 3
      %p217 = por %p215, %p216
      %p219 = scmp.ne.s32.totalorder %s204, %s218
      %p220 = scmp.eq.s32.totalorder %s24, 0
      %p221 = por %p219, %p220
      %s223 = sadd.s32 %s222, 1
      %p226 = scmp.eq.s32.totalorder %s18, 3
      %p227 = scmp.ne.s32.totalorder %s222, %s224
      %p228 = scmp.eq.s32.totalorder %s18, 0
      %p229 = por %p227, %p228
      %p230 = scmp.ne.s32.totalorder %s222, %s224
      %p231 = scmp.eq.s32.totalorder %s23, 3
      %p232 = por %p230, %p231
      %p233 = scmp.ne.s32.totalorder %s224, %s225
      %p234 = scmp.eq.s32.totalorder %s23, 0
      %p235 = por %p233, %p234
      %p236 = scmp.ne.s32.totalorder %s224, %s225
      %p237 = scmp.eq.s32.totalorder %s24, 3
      %p238 = por %p236, %p237
      %p240 = scmp.ne.s32.totalorder %s225, %s239
      %p241 = scmp.eq.s32.totalorder %s24, 0
      %p242 = por %p240, %p241
      %s244 = sadd.s32 %s243, 1
      %p247 = scmp.eq.s32.totalorder %s18, 3
      %p248 = scmp.ne.s32.totalorder %s243, %s245
      %p249 = scmp.eq.s32.totalorder %s18, 0
      %p250 = por %p248, %p249
      %p251 = scmp.ne.s32.totalorder %s243, %s245
      %p252 = scmp.eq.s32.totalorder %s23, 3
      %p253 = por %p251, %p252
      %p254 = scmp.ne.s32.totalorder %s245, %s246
      %p255 = scmp.eq.s32.totalorder %s23, 0
      %p256 = por %p254, %p255
      %p257 = scmp.ne.s32.totalorder %s245, %s246
      %p258 = scmp.eq.s32.totalorder %s24, 3
      %p259 = por %p257, %p258
      %p261 = scmp.ne.s32.totalorder %s246, %s260
      %p262 = scmp.eq.s32.totalorder %s24, 0
      %p263 = por %p261, %p262
      %s264 = ssub.s32 %s25, %s37
      %s265 = ssub.s32 %s26, %s33
      %s266 = sor.u32 %s264, %s265
      %p267 = scmp.eq.s32.totalorder %s266, 0
      %s269 = sadd.s32 %s268, 1
      %s270 = scalar_select %p267, %s268, %s269
      %p273 = pneg %p267
      %p274 = scmp.eq.s32.totalorder %s18, 3
      %p275 = por %p273, %p274
      %p276 = scmp.ne.s32.totalorder %s268, %s271
      %p277 = scmp.eq.s32.totalorder %s18, 0
      %p278 = por %p276, %p277
      %p279 = scmp.ne.s32.totalorder %s268, %s271
      %p280 = scmp.eq.s32.totalorder %s23, 3
      %p281 = por %p279, %p280
      %p282 = scmp.ne.s32.totalorder %s271, %s272
      %p283 = scmp.eq.s32.totalorder %s23, 0
      %p284 = por %p282, %p283
      %p285 = scmp.ne.s32.totalorder %s271, %s272
      %p286 = scmp.eq.s32.totalorder %s24, 3
      %p287 = por %p285, %p286
      %p289 = scmp.ne.s32.totalorder %s272, %s288
      %p290 = scmp.eq.s32.totalorder %s24, 0
      %p291 = por %p289, %p290
      %p292 = scmp.le.s32.totalorder 1, %s18
      %p293 = scmp.lt.s32.totalorder %s18, 5
      %p294 = pnand %p292, %p293
      %p295 = pneg %p294
      // Predicated region
      $region9: #{tpu_custom_call.1} parent=5 // pred_check
        _
      $region10: #{tpu_custom_call.1} parent=5 // pred_check_branch
        %297 = sbr.rel (%p294) target = $region12
      $region11: #{tpu_custom_call.1} parent=5 // pred_region
        %s298 = ssub.s32 %s18, 1
        // Predicated region
        $region13: #{tpu_custom_call.1} parent=11 // pred_check
          %p299 = pneg %p151
        $region14: #{tpu_custom_call.1} parent=11 // pred_check_branch
          %301 = sbr.rel (%p299) target = $region16
        $region15: #{tpu_custom_call.1} parent=11 // pred_region
          _
        $region16: #{tpu_custom_call.1} parent=11 // pred_fallthru
          _
        // Predicated region
        $region17: #{tpu_custom_call.1} parent=11 // pred_check
          %p302 = pneg %p172
        $region18: #{tpu_custom_call.1} parent=11 // pred_check_branch
          %304 = sbr.rel (%p302) target = $region20
        $region19: #{tpu_custom_call.1} parent=11 // pred_region
          _
        $region20: #{tpu_custom_call.1} parent=11 // pred_fallthru
          _
        // Predicated region
        $region21: #{tpu_custom_call.1} parent=11 // pred_check
          %p305 = pneg %p193
        $region22: #{tpu_custom_call.1} parent=11 // pred_check_branch
          %307 = sbr.rel (%p305) target = $region24
        $region23: #{tpu_custom_call.1} parent=11 // pred_region
          _
        $region24: #{tpu_custom_call.1} parent=11 // pred_fallthru
          _
        // Predicated region
        $region25: #{tpu_custom_call.1} parent=11 // pred_check
          %p308 = pneg %p214
        $region26: #{tpu_custom_call.1} parent=11 // pred_check_branch
          %310 = sbr.rel (%p308) target = $region28
        $region27: #{tpu_custom_call.1} parent=11 // pred_region
          _
        $region28: #{tpu_custom_call.1} parent=11 // pred_fallthru
          _
        // Predicated region
        $region29: #{tpu_custom_call.1} parent=11 // pred_check
          %p311 = pneg %p235
        $region30: #{tpu_custom_call.1} parent=11 // pred_check_branch
          %313 = sbr.rel (%p311) target = $region32
        $region31: #{tpu_custom_call.1} parent=11 // pred_region
          _
        $region32: #{tpu_custom_call.1} parent=11 // pred_fallthru
          _
        // Predicated region
        $region33: #{tpu_custom_call.1} parent=11 // pred_check
          %p314 = pneg %p256
        $region34: #{tpu_custom_call.1} parent=11 // pred_check_branch
          %316 = sbr.rel (%p314) target = $region36
        $region35: #{tpu_custom_call.1} parent=11 // pred_region
          _
        $region36: #{tpu_custom_call.1} parent=11 // pred_fallthru
          _
      $region12: #{tpu_custom_call.1} parent=5 // pred_fallthru
        _
      %p317 = scmp.lt.s32.totalorder %s18, 4
      // Predicated region
      $region37: #{tpu_custom_call.1} parent=5 // pred_check
        %p318 = pneg %p317
      $region38: #{tpu_custom_call.1} parent=5 // pred_check_branch
        %320 = sbr.rel (%p318) target = $region40
      $region39: #{tpu_custom_call.1} parent=5 // pred_region
        // Predicated region
        $region41: #{tpu_custom_call.1} parent=39 // pred_check
          %p321 = pneg %p52
        $region42: #{tpu_custom_call.1} parent=39 // pred_check_branch
          %323 = sbr.rel (%p321) target = $region44
        $region43: #{tpu_custom_call.1} parent=39 // pred_region
          %s324 = smul.u32 8, %s26
          %p325 = scmp.lt.s32.totalorder %s25, 1
          %s326 = scalar_select %p325, %s25, 1
          %p327 = scmp.lt.s32.totalorder %s324, 15
          %s328 = scalar_select %p327, %s324, 15
          %s329 = smul.addr %s328, 2
          %s330 = smul.addr %s326, 32
          %s331 = sadd.s32 %s329, %s330
          %s332 = smul.addr %s331, 4
          %s333 = scalar_lea.vmem %s0, %s332
          %s334 = smul.u32 8, %s26
        $region44: #{tpu_custom_call.1} parent=39 // pred_fallthru
          _
        // Predicated region
        $region45: #{tpu_custom_call.1} parent=39 // pred_check
          %p335 = pneg %p88
        $region46: #{tpu_custom_call.1} parent=39 // pred_check_branch
          %337 = sbr.rel (%p335) target = $region48
        $region47: #{tpu_custom_call.1} parent=39 // pred_region
          %s338 = smul.u32 %s26, 8
          %s339 = ssub.s32 %s338, 1
          %p340 = scmp.gt.s32.totalorder %s339, 0
          %s341 = scalar_select %p340, %s339, 0
          %p342 = scmp.lt.s32.totalorder %s25, 1
          %s343 = scalar_select %p342, %s25, 1
          %p344 = scmp.lt.s32.totalorder %s341, 15
          %s345 = scalar_select %p344, %s341, 15
          %s346 = smul.addr %s345, 2
          %s347 = smul.addr %s343, 32
          %s348 = sadd.s32 %s346, %s347
          %s349 = smul.addr %s348, 4
          %s350 = scalar_lea.vmem %s1, %s349
          %s351 = smul.u32 %s26, 8
          %s352 = ssub.s32 %s351, 1
          %p353 = scmp.gt.s32.totalorder %s352, 0
          %s354 = scalar_select %p353, %s352, 0
        $region48: #{tpu_custom_call.1} parent=39 // pred_fallthru
          _
        // Predicated region
        $region49: #{tpu_custom_call.1} parent=39 // pred_check
          %p355 = pneg %p124
        $region50: #{tpu_custom_call.1} parent=39 // pred_check_branch
          %357 = sbr.rel (%p355) target = $region52
        $region51: #{tpu_custom_call.1} parent=39 // pred_region
          %s358 = smul.u32 %s26, 8
          %s359 = sadd.s32 %s358, 8
          %p360 = scmp.lt.s32.totalorder %s359, 15
          %s361 = scalar_select %p360, %s359, 15
          %p362 = scmp.lt.s32.totalorder %s25, 1
          %s363 = scalar_select %p362, %s25, 1
          %p364 = scmp.lt.s32.totalorder %s361, 15
          %s365 = scalar_select %p364, %s361, 15
          %s366 = smul.addr %s365, 2
          %s367 = smul.addr %s363, 32
          %s368 = sadd.s32 %s366, %s367
          %s369 = smul.addr %s368, 4
          %s370 = scalar_lea.vmem %s2, %s369
          %s371 = smul.u32 %s26, 8
          %s372 = sadd.s32 %s371, 8
          %p373 = scmp.lt.s32.totalorder %s372, 15
          %s374 = scalar_select %p373, %s372, 15
        $region52: #{tpu_custom_call.1} parent=39 // pred_fallthru
          _
      $region40: #{tpu_custom_call.1} parent=5 // pred_fallthru
        _
      %p375 = scmp.le.s32.totalorder 1, %s18
      %p376 = scmp.lt.s32.totalorder %s18, 5
      %p377 = pnand %p375, %p376
      %p378 = pneg %p377
      // Predicated region
      $region53: #{tpu_custom_call.1} parent=5 // pred_check
        _
      $region54: #{tpu_custom_call.1} parent=5 // pred_check_branch
        %380 = sbr.rel (%p377) target = $region56
      $region55: #{tpu_custom_call.1} parent=5 // pred_region
        %s381 = ssub.s32 %s18, 1
        %s382 = smul.u32 8, %s28
        %p383 = scmp.lt.s32.totalorder %s27, 1
        %s384 = scalar_select %p383, %s27, 1
        %p385 = scmp.lt.s32.totalorder %s382, 15
        %s386 = scalar_select %p385, %s382, 15
        %s387 = smul.addr %s386, 2
        %s388 = smul.addr %s384, 32
        %s389 = sadd.s32 %s387, %s388
        %s390 = smul.addr %s389, 4
        %s391 = scalar_lea.vmem %s0, %s390
        %p392 = pneg %p58
        %p393 = pneg %p55
        %s394 = smul.u32 %s28, 8
        %s395 = ssub.s32 %s394, 1
        %p396 = scmp.gt.s32.totalorder %s395, 0
        %s397 = scalar_select %p396, %s395, 0
        %p398 = scmp.lt.s32.totalorder %s27, 1
        %s399 = scalar_select %p398, %s27, 1
        %p400 = scmp.lt.s32.totalorder %s397, 15
        %s401 = scalar_select %p400, %s397, 15
        %s402 = smul.addr %s401, 2
        %s403 = smul.addr %s399, 32
        %s404 = sadd.s32 %s402, %s403
        %s405 = smul.addr %s404, 4
        %s406 = scalar_lea.vmem %s1, %s405
        %p407 = pneg %p94
        %p408 = pneg %p91
        %s409 = smul.u32 %s28, 8
        %s410 = sadd.s32 %s409, 8
        %p411 = scmp.lt.s32.totalorder %s410, 15
        %s412 = scalar_select %p411, %s410, 15
        %p413 = scmp.lt.s32.totalorder %s27, 1
        %s414 = scalar_select %p413, %s27, 1
        %p415 = scmp.lt.s32.totalorder %s412, 15
        %s416 = scalar_select %p415, %s412, 15
        %s417 = smul.addr %s416, 2
        %s418 = smul.addr %s414, 32
        %s419 = sadd.s32 %s417, %s418
        %s420 = smul.addr %s419, 4
        %s421 = scalar_lea.vmem %s2, %s420
        %p422 = pneg %p130
        %p423 = pneg %p127
        %p424 = pneg %p151
        %p425 = pneg %p148
        %p426 = pneg %p172
        %p427 = pneg %p169
        %p428 = pneg %p193
        %p429 = pneg %p190
        %p430 = pneg %p214
        %p431 = pneg %p211
        %p432 = pneg %p235
        %p433 = pneg %p232
        %p434 = pneg %p256
        %p435 = pneg %p253
        %p436 = pneg %p284
        %p437 = pneg %p281
        %s438 = sand.u32 %s271, 1
        %s439 = scalar_lea.sflag [#allocation3], %s438
        %s440 = sand.u32 %s271, 1
        %s441 = smul.addr %s440, 128
        %s442 = scalar_lea.vmem [#allocation2], %s441
        %s443 = smul.u32 8, %s28
        %p444 = scmp.lt.s32.totalorder %s27, 1
        %s445 = scalar_select %p444, %s27, 1
        %p446 = scmp.lt.s32.totalorder %s443, 15
        %s447 = scalar_select %p446, %s443, 15
        %s448 = smul.addr %s447, 2
        %s449 = smul.addr %s445, 32
        %s450 = sadd.s32 %s448, %s449
        %s451 = smul.addr %s450, 4
        %s452 = scalar_lea.vmem %s0, %s451
        %s453 = smul.u32 8, %s28
        %s454 = smul.u32 %s28, 8
        %s455 = ssub.s32 %s454, 1
        %p456 = scmp.gt.s32.totalorder %s455, 0
        %s457 = scalar_select %p456, %s455, 0
        %p458 = scmp.lt.s32.totalorder %s27, 1
        %s459 = scalar_select %p458, %s27, 1
        %p460 = scmp.lt.s32.totalorder %s457, 15
        %s461 = scalar_select %p460, %s457, 15
        %s462 = smul.addr %s461, 2
        %s463 = smul.addr %s459, 32
        %s464 = sadd.s32 %s462, %s463
        %s465 = smul.addr %s464, 4
        %s466 = scalar_lea.vmem %s1, %s465
        %s467 = smul.u32 %s28, 8
        %s468 = ssub.s32 %s467, 1
        %p469 = scmp.gt.s32.totalorder %s468, 0
        %s470 = scalar_select %p469, %s468, 0
        %s471 = smul.u32 %s28, 8
        %s472 = sadd.s32 %s471, 8
        %p473 = scmp.lt.s32.totalorder %s472, 15
        %s474 = scalar_select %p473, %s472, 15
        %p475 = scmp.lt.s32.totalorder %s27, 1
        %s476 = scalar_select %p475, %s27, 1
        %p477 = scmp.lt.s32.totalorder %s474, 15
        %s478 = scalar_select %p477, %s474, 15
        %s479 = smul.addr %s478, 2
        %s480 = smul.addr %s476, 32
        %s481 = sadd.s32 %s479, %s480
        %s482 = smul.addr %s481, 4
        %s483 = scalar_lea.vmem %s2, %s482
        %s484 = smul.u32 %s28, 8
        %s485 = sadd.s32 %s484, 8
        %p486 = scmp.lt.s32.totalorder %s485, 15
        %s487 = scalar_select %p486, %s485, 15
        %s488 = smul.u32 16, %s28
        %v490 = vld [vmem:[%s466] sm:$0xf]
        %v491 = vld [vmem:[%s466 + $0x4] sm:$0xf]
        %v492 = vld [vmem:[%s452] sm:$0xf]
        %v493 = vld [vmem:[%s452 + $0x4] sm:$0xf]
        %v494 = vld [vmem:[%s452 + $0x8] sm:$0xf]
        %v495 = vld [vmem:[%s452 + $0xc] sm:$0xf]
        %v496 = vld [vmem:[%s452 + $0x10] sm:$0xf]
        %v497 = vld [vmem:[%s452 + $0x14] sm:$0xf]
        %v498 = vld [vmem:[%s452 + $0x18] sm:$0xf]
        %v499 = vld [vmem:[%s452 + $0x1c] sm:$0xf]
        %v500 = vld [vmem:[%s452 + $0x20] sm:$0xf]
        %v501 = vld [vmem:[%s452 + $0x24] sm:$0xf]
        %v502 = vld [vmem:[%s452 + $0x28] sm:$0xf]
        %v503 = vld [vmem:[%s452 + $0x2c] sm:$0xf]
        %v504 = vld [vmem:[%s452 + $0x30] sm:$0xf]
        %v505 = vld [vmem:[%s452 + $0x34] sm:$0xf]
        %v506 = vld [vmem:[%s452 + $0x38] sm:$0xf]
        %v507 = vld [vmem:[%s452 + $0x3c] sm:$0xf]
        %v508 = vld [vmem:[%s483] sm:$0xf]
        %v509 = vld [vmem:[%s483 + $0x4] sm:$0xf]
        %v510 = vld [vmem:[%s3] sm:$0xff]
        %v511 = vld [vmem:[%s4] sm:$0x3]
        %v513 = vlaneseq
        %v514 = vshrl.u32 %v513, 7
        %v515 = vsub.s32 0, %v514
        %v516 = vrot.slane %v511, %v515
        %v517 = vlaneseq
        %v518 = vshrl.u32 %v517, 7
        %v519 = vsub.s32 1, %v518
        %v520 = vrot.slane %v511, %v519
        %v543 = vunpack.c.l.b16 %v490
        %v544 = vunpack.c.l.b16 %v491
        %v545 = vunpack.c.l.b16 %v492
        %v546 = vunpack.c.l.b16 %v493
        %v547 = vunpack.c.l.b16 %v494
        %v548 = vunpack.c.l.b16 %v495
        %v549 = vunpack.c.l.b16 %v496
        %v550 = vunpack.c.l.b16 %v497
        %v551 = vunpack.c.l.b16 %v498
        %v552 = vunpack.c.l.b16 %v499
        %v553 = vunpack.c.l.b16 %v500
        %v554 = vunpack.c.l.b16 %v501
        %v555 = vunpack.c.l.b16 %v502
        %v556 = vunpack.c.l.b16 %v503
        %v557 = vunpack.c.l.b16 %v504
        %v558 = vunpack.c.l.b16 %v505
        %v559 = vunpack.c.l.b16 %v506
        %v560 = vunpack.c.l.b16 %v507
        %v561 = vunpack.c.l.b16 %v508
        %v562 = vunpack.c.l.b16 %v509
        %v563 = vpack.c.b16 %v544, %v543
        %v564 = vpack.c.b16 %v546, %v545
        %v565 = vpack.c.b16 %v548, %v547
        %v566 = vpack.c.b16 %v550, %v549
        %v567 = vpack.c.b16 %v552, %v551
        %v568 = vpack.c.b16 %v554, %v553
        %v569 = vpack.c.b16 %v556, %v555
        %v570 = vpack.c.b16 %v558, %v557
        %v571 = vpack.c.b16 %v560, %v559
        %v572 = vpack.c.b16 %v562, %v561
        %v574 = vunpack.c.l.b16 %v510
        %v575 = vunpack.c.h.b16 %v510
        %v576 = vpack.c.b16 %v574, %v574
        %v577 = vpack.c.b16 %v575, %v575
        %vm578 = vcmask 64512
        %v580 = vsel %vm578, %v563, 0
        %v583 = vsel %vm578, %v564, 0
        %v586 = vsel %vm578, %v565, 0
        %v589 = vsel %vm578, %v566, 0
        %v592 = vsel %vm578, %v567, 0
        %v595 = vsel %vm578, %v568, 0
        %v598 = vsel %vm578, %v569, 0
        %v601 = vsel %vm578, %v570, 0
        %v604 = vsel %vm578, %v571, 0
        %v607 = vsel %vm578, %v572, 0
        %vm609 = vcmask 1043456
        %v611 = vsel %vm609, %v576, 0
        %v614 = vsel %vm609, %v577, 0
        %616 = vmatprep.subr.bf16.mxu0 %v614
        %617 = vmatpush1.bf16.msra.mxu0 %v611
        %618 = vmatprep.subr.bf16.mxu0 0
        %619 = vmatpush1.bf16.msra.mxu0 0
        %620 = vmatprep.subr.bf16.mxu0 0
        %621 = vmatpush1.bf16.msra.mxu0 0
        %622 = vmatprep.subr.bf16.mxu0 0
        %623 = vmatpush1.bf16.msra.mxu0 0
        %624 = vmatprep.subr.bf16.mxu0 0
        %625 = vmatpush1.bf16.msra.mxu0 0
        %626 = vmatprep.subr.bf16.mxu0 0
        %627 = vmatpush1.bf16.msra.mxu0 0
        %628 = vmatprep.subr.bf16.mxu0 0
        %629 = vmatpush1.bf16.msra.mxu0 0
        %630 = vmatprep.subr.bf16.mxu0 0
        %631 = vmatpush1.bf16.msra.mxu0 0
        %632 = vmatprep.subr.bf16.mxu0 0
        %633 = vmatpush1.bf16.msra.mxu0 0
        %634 = vmatprep.subr.bf16.mxu0 0
        %635 = vmatpush1.bf16.msra.mxu0 0
        %636 = vmatprep.subr.bf16.mxu0 0
        %637 = vmatpush1.bf16.msra.mxu0 0
        %638 = vmatprep.subr.bf16.mxu0 0
        %639 = vmatpush1.bf16.msra.mxu0 0
        %640 = vmatprep.subr.bf16.mxu0 0
        %641 = vmatpush1.bf16.msra.mxu0 0
        %642 = vmatprep.subr.bf16.mxu0 0
        %643 = vmatpush1.bf16.msra.mxu0 0
        %644 = vmatprep.subr.bf16.mxu0 0
        %645 = vmatpush1.bf16.msra.mxu0 0
        %646 = vmatprep.subr.bf16.mxu0 0
        %647 = vmatpush1.bf16.msra.mxu0 0
        %648 = vmatprep.mubr.bf16.mxu0 0
        %649 = vmatmul.mubr.bf16.gmra.mrb[0].mxu0 %v580
        %v650 = vpop.f32.mrb[0].mxu0
        %v651 = vadd.f32 %v516, %v650
        %v652 = vpop.f32.mrb[0].mxu0
        %v653 = vadd.f32 %v520, %v652
        %v654 = vpop.f32.mrb[0].mxu0
        %v655 = vadd.f32 %v516, %v654
        %v656 = vpop.f32.mrb[0].mxu0
        %v657 = vadd.f32 %v520, %v656
        %658 = vmatprep.mubr.bf16.mxu0 0
        %659 = vmatmul.mubr.bf16.gmra.mrb[0].mxu0 %v583
        %v660 = vpop.f32.mrb[0].mxu0
        %v661 = vadd.f32 %v516, %v660
        %v662 = vpop.f32.mrb[0].mxu0
        %v663 = vadd.f32 %v520, %v662
        %v664 = vpop.f32.mrb[0].mxu0
        %v665 = vadd.f32 %v516, %v664
        %v666 = vpop.f32.mrb[0].mxu0
        %v667 = vadd.f32 %v520, %v666
        %668 = vmatprep.mubr.bf16.mxu0 0
        %669 = vmatmul.mubr.bf16.gmra.mrb[0].mxu0 %v586
        %v670 = vpop.f32.mrb[0].mxu0
        %v671 = vadd.f32 %v516, %v670
        %v672 = vpop.f32.mrb[0].mxu0
        %v673 = vadd.f32 %v520, %v672
        %v674 = vpop.f32.mrb[0].mxu0
        %v675 = vadd.f32 %v516, %v674
        %v676 = vpop.f32.mrb[0].mxu0
        %v677 = vadd.f32 %v520, %v676
        %678 = vmatprep.mubr.bf16.mxu0 0
        %679 = vmatmul.mubr.bf16.gmra.mrb[0].mxu0 %v589
        %v680 = vpop.f32.mrb[0].mxu0
        %v681 = vadd.f32 %v516, %v680
        %v682 = vpop.f32.mrb[0].mxu0
        %v683 = vadd.f32 %v520, %v682
        %v684 = vpop.f32.mrb[0].mxu0
        %v685 = vadd.f32 %v516, %v684
        %v686 = vpop.f32.mrb[0].mxu0
        %v687 = vadd.f32 %v520, %v686
        %688 = vmatprep.mubr.bf16.mxu0 0
        %689 = vmatmul.mubr.bf16.gmra.mrb[0].mxu0 %v592
        %v690 = vpop.f32.mrb[0].mxu0
        %v691 = vadd.f32 %v516, %v690
        %v692 = vpop.f32.mrb[0].mxu0
        %v693 = vadd.f32 %v520, %v692
        %v694 = vpop.f32.mrb[0].mxu0
        %v695 = vadd.f32 %v516, %v694
        %v696 = vpop.f32.mrb[0].mxu0
        %v697 = vadd.f32 %v520, %v696
        %698 = vmatprep.mubr.bf16.mxu0 0
        %699 = vmatmul.mubr.bf16.gmra.mrb[0].mxu0 %v595
        %v700 = vpop.f32.mrb[0].mxu0
        %v701 = vadd.f32 %v516, %v700
        %v702 = vpop.f32.mrb[0].mxu0
        %v703 = vadd.f32 %v520, %v702
        %v704 = vpop.f32.mrb[0].mxu0
        %v705 = vadd.f32 %v516, %v704
        %v706 = vpop.f32.mrb[0].mxu0
        %v707 = vadd.f32 %v520, %v706
        %708 = vmatprep.mubr.bf16.mxu0 0
        %709 = vmatmul.mubr.bf16.gmra.mrb[0].mxu0 %v598
        %v710 = vpop.f32.mrb[0].mxu0
        %v711 = vadd.f32 %v516, %v710
        %v712 = vpop.f32.mrb[0].mxu0
        %v713 = vadd.f32 %v520, %v712
        %v714 = vpop.f32.mrb[0].mxu0
        %v715 = vadd.f32 %v516, %v714
        %v716 = vpop.f32.mrb[0].mxu0
        %v717 = vadd.f32 %v520, %v716
        %718 = vmatprep.mubr.bf16.mxu0 0
        %719 = vmatmul.mubr.bf16.gmra.mrb[0].mxu0 %v601
        %v720 = vpop.f32.mrb[0].mxu0
        %v721 = vadd.f32 %v516, %v720
        %v722 = vpop.f32.mrb[0].mxu0
        %v723 = vadd.f32 %v520, %v722
        %v724 = vpop.f32.mrb[0].mxu0
        %v725 = vadd.f32 %v516, %v724
        %v726 = vpop.f32.mrb[0].mxu0
        %v727 = vadd.f32 %v520, %v726
        %728 = vmatprep.mubr.bf16.mxu0 0
        %729 = vmatmul.mubr.bf16.gmra.mrb[0].mxu0 %v604
        %v730 = vpop.f32.mrb[0].mxu0
        %v731 = vadd.f32 %v516, %v730
        %v732 = vpop.f32.mrb[0].mxu0
        %v733 = vadd.f32 %v520, %v732
        %v734 = vpop.f32.mrb[0].mxu0
        %v735 = vadd.f32 %v516, %v734
        %v736 = vpop.f32.mrb[0].mxu0
        %v737 = vadd.f32 %v520, %v736
        %738 = vmatprep.mubr.bf16.mxu0 0
        %739 = vmatmul.mubr.bf16.gmra.mrb[0].mxu0 %v607
        %v740 = vpop.f32.mrb[0].mxu0
        %v741 = vadd.f32 %v516, %v740
        %v742 = vpop.f32.mrb[0].mxu0
        %v743 = vadd.f32 %v520, %v742
        %v744 = vpop.f32.mrb[0].mxu0
        %v745 = vadd.f32 %v516, %v744
        %v746 = vpop.f32.mrb[0].mxu0
        %v747 = vadd.f32 %v520, %v746
        %748 = vdwg.mxu0
        %p749 = scmp.eq.s32.totalorder %s28, 0
        %s750 = scalar_select %p749, 1, 0
        %v751 = vstv %s750
        %vm752 = vcmp.eq.s32.totalorder %v751, 1
        %p753 = scmp.eq.s32.totalorder %s28, 1
        %s754 = scalar_select %p753, 1, 0
        %v755 = vstv %s754
        %vm756 = vcmp.eq.s32.totalorder %v755, 1
        %v757 = vsel %vm752, 1, 0
        %v758 = vsel %vm756, 1, 0
        %vm759 = vcmp.eq.s32.totalorder %v757, 1
        %vm760 = vcmp.eq.s32.totalorder %v758, 1
        %v761 = vsel %vm759, 0.0, %v651
        %v762 = vsel %vm759, 0.0, %v653
        %v763 = vsel %vm759, 0.0, %v655
        %v764 = vsel %vm759, 0.0, %v657
        %v765 = vsel 0, 0.0, %v661
        %v766 = vsel 0, 0.0, %v663
        %v767 = vsel 0, 0.0, %v665
        %v768 = vsel 0, 0.0, %v667
        %v769 = vsel 0, 0.0, %v671
        %v770 = vsel 0, 0.0, %v673
        %v771 = vsel 0, 0.0, %v675
        %v772 = vsel 0, 0.0, %v677
        %v773 = vsel 0, 0.0, %v681
        %v774 = vsel 0, 0.0, %v683
        %v775 = vsel 0, 0.0, %v685
        %v776 = vsel 0, 0.0, %v687
        %v777 = vsel 0, 0.0, %v691
        %v778 = vsel 0, 0.0, %v693
        %v779 = vsel 0, 0.0, %v695
        %v780 = vsel 0, 0.0, %v697
        %v781 = vsel 0, 0.0, %v701
        %v782 = vsel 0, 0.0, %v703
        %v783 = vsel 0, 0.0, %v705
        %v784 = vsel 0, 0.0, %v707
        %v785 = vsel 0, 0.0, %v711
        %v786 = vsel 0, 0.0, %v713
        %v787 = vsel 0, 0.0, %v715
        %v788 = vsel 0, 0.0, %v717
        %v789 = vsel 0, 0.0, %v721
        %v790 = vsel 0, 0.0, %v723
        %v791 = vsel 0, 0.0, %v725
        %v792 = vsel 0, 0.0, %v727
        %v793 = vsel 0, 0.0, %v731
        %v794 = vsel 0, 0.0, %v733
        %v795 = vsel 0, 0.0, %v735
        %v796 = vsel 0, 0.0, %v737
        %v797 = vsel %vm760, 0.0, %v741
        %v798 = vsel %vm760, 0.0, %v743
        %v799 = vsel %vm760, 0.0, %v745
        %v800 = vsel %vm760, 0.0, %v747
        %v801 = vld [vmem:[%s5] sm:$0xff]
        %v802 = vld [vmem:[%s5 + $0x8] sm:$0xff]
        %v803 = vld [vmem:[%s5 + $0x10] sm:$0x1]
        %v804 = vld [vmem:[%s5 + $0x18] sm:$0x1]
        %v805 = vlaneseq
        %v806 = vshrl.u32 %v805, 7
        %v807 = vsub.s32 4, %v806
        %v808 = vrot.slane %v801, %v807
        %v809 = vlaneseq
        %v810 = vshrl.u32 %v809, 7
        %v811 = vsub.s32 4, %v810
        %v812 = vrot.slane %v802, %v811
        %v813 = vmul.f32 %v765, %v808
        %v814 = vmul.f32 %v766, %v812
        %v815 = vmul.f32 %v767, %v808
        %v816 = vmul.f32 %v768, %v812
        %v817 = vmul.f32 %v769, %v808
        %v818 = vmul.f32 %v770, %v812
        %v819 = vmul.f32 %v771, %v808
        %v820 = vmul.f32 %v772, %v812
        %v821 = vmul.f32 %v773, %v808
        %v822 = vmul.f32 %v774, %v812
        %v823 = vmul.f32 %v775, %v808
        %v824 = vmul.f32 %v776, %v812
        %v825 = vmul.f32 %v777, %v808
        %v826 = vmul.f32 %v778, %v812
        %v827 = vmul.f32 %v779, %v808
        %v828 = vmul.f32 %v780, %v812
        %v829 = vmul.f32 %v781, %v808
        %v830 = vmul.f32 %v782, %v812
        %v831 = vmul.f32 %v783, %v808
        %v832 = vmul.f32 %v784, %v812
        %v833 = vmul.f32 %v785, %v808
        %v834 = vmul.f32 %v786, %v812
        %v835 = vmul.f32 %v787, %v808
        %v836 = vmul.f32 %v788, %v812
        %v837 = vmul.f32 %v789, %v808
        %v838 = vmul.f32 %v790, %v812
        %v839 = vmul.f32 %v791, %v808
        %v840 = vmul.f32 %v792, %v812
        %v841 = vmul.f32 %v793, %v808
        %v842 = vmul.f32 %v794, %v812
        %v843 = vmul.f32 %v795, %v808
        %v844 = vmul.f32 %v796, %v812
        %v845 = vlaneseq
        %v846 = vshrl.u32 %v845, 7
        %v847 = vsub.s32 1, %v846
        %v848 = vrot.slane %v801, %v847
        %v849 = vlaneseq
        %v850 = vshrl.u32 %v849, 7
        %v851 = vsub.s32 1, %v850
        %v852 = vrot.slane %v802, %v851
        %v853 = vmul.f32 %v761, %v848
        %v854 = vmul.f32 %v762, %v852
        %v855 = vmul.f32 %v763, %v848
        %v856 = vmul.f32 %v764, %v852
        %v857 = vmul.f32 %v765, %v848
        %v858 = vmul.f32 %v766, %v852
        %v859 = vmul.f32 %v767, %v848
        %v860 = vmul.f32 %v768, %v852
        %v861 = vmul.f32 %v769, %v848
        %v862 = vmul.f32 %v770, %v852
        %v863 = vmul.f32 %v771, %v848
        %v864 = vmul.f32 %v772, %v852
        %v865 = vmul.f32 %v773, %v848
        %v866 = vmul.f32 %v774, %v852
        %v867 = vmul.f32 %v775, %v848
        %v868 = vmul.f32 %v776, %v852
        %v869 = vmul.f32 %v777, %v848
        %v870 = vmul.f32 %v778, %v852
        %v871 = vmul.f32 %v779, %v848
        %v872 = vmul.f32 %v780, %v852
        %v873 = vmul.f32 %v781, %v848
        %v874 = vmul.f32 %v782, %v852
        %v875 = vmul.f32 %v783, %v848
        %v876 = vmul.f32 %v784, %v852
        %v877 = vmul.f32 %v785, %v848
        %v878 = vmul.f32 %v786, %v852
        %v879 = vmul.f32 %v787, %v848
        %v880 = vmul.f32 %v788, %v852
        %v881 = vmul.f32 %v789, %v848
        %v882 = vmul.f32 %v790, %v852
        %v883 = vmul.f32 %v791, %v848
        %v884 = vmul.f32 %v792, %v852
        %v885 = vadd.f32 %v813, %v853
        %v886 = vadd.f32 %v814, %v854
        %v887 = vadd.f32 %v815, %v855
        %v888 = vadd.f32 %v816, %v856
        %v889 = vadd.f32 %v817, %v857
        %v890 = vadd.f32 %v818, %v858
        %v891 = vadd.f32 %v819, %v859
        %v892 = vadd.f32 %v820, %v860
        %v893 = vadd.f32 %v821, %v861
        %v894 = vadd.f32 %v822, %v862
        %v895 = vadd.f32 %v823, %v863
        %v896 = vadd.f32 %v824, %v864
        %v897 = vadd.f32 %v825, %v865
        %v898 = vadd.f32 %v826, %v866
        %v899 = vadd.f32 %v827, %v867
        %v900 = vadd.f32 %v828, %v868
        %v901 = vadd.f32 %v829, %v869
        %v902 = vadd.f32 %v830, %v870
        %v903 = vadd.f32 %v831, %v871
        %v904 = vadd.f32 %v832, %v872
        %v905 = vadd.f32 %v833, %v873
        %v906 = vadd.f32 %v834, %v874
        %v907 = vadd.f32 %v835, %v875
        %v908 = vadd.f32 %v836, %v876
        %v909 = vadd.f32 %v837, %v877
        %v910 = vadd.f32 %v838, %v878
        %v911 = vadd.f32 %v839, %v879
        %v912 = vadd.f32 %v840, %v880
        %v913 = vadd.f32 %v841, %v881
        %v914 = vadd.f32 %v842, %v882
        %v915 = vadd.f32 %v843, %v883
        %v916 = vadd.f32 %v844, %v884
        %v917 = vlaneseq
        %v918 = vshrl.u32 %v917, 7
        %v919 = vsub.s32 7, %v918
        %v920 = vrot.slane %v801, %v919
        %v921 = vlaneseq
        %v922 = vshrl.u32 %v921, 7
        %v923 = vsub.s32 7, %v922
        %v924 = vrot.slane %v802, %v923
        %v925 = vmul.f32 %v769, %v920
        %v926 = vmul.f32 %v770, %v924
        %v927 = vmul.f32 %v771, %v920
        %v928 = vmul.f32 %v772, %v924
        %v929 = vmul.f32 %v773, %v920
        %v930 = vmul.f32 %v774, %v924
        %v931 = vmul.f32 %v775, %v920
        %v932 = vmul.f32 %v776, %v924
        %v933 = vmul.f32 %v777, %v920
        %v934 = vmul.f32 %v778, %v924
        %v935 = vmul.f32 %v779, %v920
        %v936 = vmul.f32 %v780, %v924
        %v937 = vmul.f32 %v781, %v920
        %v938 = vmul.f32 %v782, %v924
        %v939 = vmul.f32 %v783, %v920
        %v940 = vmul.f32 %v784, %v924
        %v941 = vmul.f32 %v785, %v920
        %v942 = vmul.f32 %v786, %v924
        %v943 = vmul.f32 %v787, %v920
        %v944 = vmul.f32 %v788, %v924
        %v945 = vmul.f32 %v789, %v920
        %v946 = vmul.f32 %v790, %v924
        %v947 = vmul.f32 %v791, %v920
        %v948 = vmul.f32 %v792, %v924
        %v949 = vmul.f32 %v793, %v920
        %v950 = vmul.f32 %v794, %v924
        %v951 = vmul.f32 %v795, %v920
        %v952 = vmul.f32 %v796, %v924
        %v953 = vmul.f32 %v797, %v920
        %v954 = vmul.f32 %v798, %v924
        %v955 = vmul.f32 %v799, %v920
        %v956 = vmul.f32 %v800, %v924
        %v957 = vadd.f32 %v885, %v925
        %v958 = vadd.f32 %v886, %v926
        %v959 = vadd.f32 %v887, %v927
        %v960 = vadd.f32 %v888, %v928
        %v961 = vadd.f32 %v889, %v929
        %v962 = vadd.f32 %v890, %v930
        %v963 = vadd.f32 %v891, %v931
        %v964 = vadd.f32 %v892, %v932
        %v965 = vadd.f32 %v893, %v933
        %v966 = vadd.f32 %v894, %v934
        %v967 = vadd.f32 %v895, %v935
        %v968 = vadd.f32 %v896, %v936
        %v969 = vadd.f32 %v897, %v937
        %v970 = vadd.f32 %v898, %v938
        %v971 = vadd.f32 %v899, %v939
        %v972 = vadd.f32 %v900, %v940
        %v973 = vadd.f32 %v901, %v941
        %v974 = vadd.f32 %v902, %v942
        %v975 = vadd.f32 %v903, %v943
        %v976 = vadd.f32 %v904, %v944
        %v977 = vadd.f32 %v905, %v945
        %v978 = vadd.f32 %v906, %v946
        %v979 = vadd.f32 %v907, %v947
        %v980 = vadd.f32 %v908, %v948
        %v981 = vadd.f32 %v909, %v949
        %v982 = vadd.f32 %v910, %v950
        %v983 = vadd.f32 %v911, %v951
        %v984 = vadd.f32 %v912, %v952
        %v985 = vadd.f32 %v913, %v953
        %v986 = vadd.f32 %v914, %v954
        %v987 = vadd.f32 %v915, %v955
        %v988 = vadd.f32 %v916, %v956
        %v989 = vlaneseq
        %v990 = vshrl.u32 %v989, 7
        %v991 = vsub.s32 0, %v990
        %v992 = vrot.slane %v801, %v991
        %v993 = vlaneseq
        %v994 = vshrl.u32 %v993, 7
        %v995 = vsub.s32 0, %v994
        %v996 = vrot.slane %v802, %v995
        %v997 = vmul.f32 %v761, %v992
        %v998 = vmul.f32 %v762, %v996
        %v999 = vmul.f32 %v763, %v992
        %v1000 = vmul.f32 %v764, %v996
        %v1001 = vmul.f32 %v765, %v992
        %v1002 = vmul.f32 %v766, %v996
        %v1003 = vmul.f32 %v767, %v992
        %v1004 = vmul.f32 %v768, %v996
        %v1005 = vmul.f32 %v769, %v992
        %v1006 = vmul.f32 %v770, %v996
        %v1007 = vmul.f32 %v771, %v992
        %v1008 = vmul.f32 %v772, %v996
        %v1009 = vmul.f32 %v773, %v992
        %v1010 = vmul.f32 %v774, %v996
        %v1011 = vmul.f32 %v775, %v992
        %v1012 = vmul.f32 %v776, %v996
        %v1013 = vmul.f32 %v777, %v992
        %v1014 = vmul.f32 %v778, %v996
        %v1015 = vmul.f32 %v779, %v992
        %v1016 = vmul.f32 %v780, %v996
        %v1017 = vmul.f32 %v781, %v992
        %v1018 = vmul.f32 %v782, %v996
        %v1019 = vmul.f32 %v783, %v992
        %v1020 = vmul.f32 %v784, %v996
        %v1021 = vmul.f32 %v785, %v992
        %v1022 = vmul.f32 %v786, %v996
        %v1023 = vmul.f32 %v787, %v992
        %v1024 = vmul.f32 %v788, %v996
        %v1025 = vmul.f32 %v789, %v992
        %v1026 = vmul.f32 %v790, %v996
        %v1027 = vmul.f32 %v791, %v992
        %v1028 = vmul.f32 %v792, %v996
        %v1029 = vlaneseq
        %v1030 = vshrl.u32 %v1029, 7
        %v1031 = vsub.s32 3, %v1030
        %v1032 = vrot.slane %v801, %v1031
        %v1033 = vlaneseq
        %v1034 = vshrl.u32 %v1033, 7
        %v1035 = vsub.s32 3, %v1034
        %v1036 = vrot.slane %v802, %v1035
        %v1037 = vmul.f32 %v765, %v1032
        %v1038 = vmul.f32 %v766, %v1036
        %v1039 = vmul.f32 %v767, %v1032
        %v1040 = vmul.f32 %v768, %v1036
        %v1041 = vmul.f32 %v769, %v1032
        %v1042 = vmul.f32 %v770, %v1036
        %v1043 = vmul.f32 %v771, %v1032
        %v1044 = vmul.f32 %v772, %v1036
        %v1045 = vmul.f32 %v773, %v1032
        %v1046 = vmul.f32 %v774, %v1036
        %v1047 = vmul.f32 %v775, %v1032
        %v1048 = vmul.f32 %v776, %v1036
        %v1049 = vmul.f32 %v777, %v1032
        %v1050 = vmul.f32 %v778, %v1036
        %v1051 = vmul.f32 %v779, %v1032
        %v1052 = vmul.f32 %v780, %v1036
        %v1053 = vmul.f32 %v781, %v1032
        %v1054 = vmul.f32 %v782, %v1036
        %v1055 = vmul.f32 %v783, %v1032
        %v1056 = vmul.f32 %v784, %v1036
        %v1057 = vmul.f32 %v785, %v1032
        %v1058 = vmul.f32 %v786, %v1036
        %v1059 = vmul.f32 %v787, %v1032
        %v1060 = vmul.f32 %v788, %v1036
        %v1061 = vmul.f32 %v789, %v1032
        %v1062 = vmul.f32 %v790, %v1036
        %v1063 = vmul.f32 %v791, %v1032
        %v1064 = vmul.f32 %v792, %v1036
        %v1065 = vmul.f32 %v793, %v1032
        %v1066 = vmul.f32 %v794, %v1036
        %v1067 = vmul.f32 %v795, %v1032
        %v1068 = vmul.f32 %v796, %v1036
        %v1069 = vadd.f32 %v997, %v1037
        %v1070 = vadd.f32 %v998, %v1038
        %v1071 = vadd.f32 %v999, %v1039
        %v1072 = vadd.f32 %v1000, %v1040
        %v1073 = vadd.f32 %v1001, %v1041
        %v1074 = vadd.f32 %v1002, %v1042
        %v1075 = vadd.f32 %v1003, %v1043
        %v1076 = vadd.f32 %v1004, %v1044
        %v1077 = vadd.f32 %v1005, %v1045
        %v1078 = vadd.f32 %v1006, %v1046
        %v1079 = vadd.f32 %v1007, %v1047
        %v1080 = vadd.f32 %v1008, %v1048
        %v1081 = vadd.f32 %v1009, %v1049
        %v1082 = vadd.f32 %v1010, %v1050
        %v1083 = vadd.f32 %v1011, %v1051
        %v1084 = vadd.f32 %v1012, %v1052
        %v1085 = vadd.f32 %v1013, %v1053
        %v1086 = vadd.f32 %v1014, %v1054
        %v1087 = vadd.f32 %v1015, %v1055
        %v1088 = vadd.f32 %v1016, %v1056
        %v1089 = vadd.f32 %v1017, %v1057
        %v1090 = vadd.f32 %v1018, %v1058
        %v1091 = vadd.f32 %v1019, %v1059
        %v1092 = vadd.f32 %v1020, %v1060
        %v1093 = vadd.f32 %v1021, %v1061
        %v1094 = vadd.f32 %v1022, %v1062
        %v1095 = vadd.f32 %v1023, %v1063
        %v1096 = vadd.f32 %v1024, %v1064
        %v1097 = vadd.f32 %v1025, %v1065
        %v1098 = vadd.f32 %v1026, %v1066
        %v1099 = vadd.f32 %v1027, %v1067
        %v1100 = vadd.f32 %v1028, %v1068
        %v1101 = vlaneseq
        %v1102 = vshrl.u32 %v1101, 7
        %v1103 = vsub.s32 6, %v1102
        %v1104 = vrot.slane %v801, %v1103
        %v1105 = vlaneseq
        %v1106 = vshrl.u32 %v1105, 7
        %v1107 = vsub.s32 6, %v1106
        %v1108 = vrot.slane %v802, %v1107
        %v1109 = vmul.f32 %v769, %v1104
        %v1110 = vmul.f32 %v770, %v1108
        %v1111 = vmul.f32 %v771, %v1104
        %v1112 = vmul.f32 %v772, %v1108
        %v1113 = vmul.f32 %v773, %v1104
        %v1114 = vmul.f32 %v774, %v1108
        %v1115 = vmul.f32 %v775, %v1104
        %v1116 = vmul.f32 %v776, %v1108
        %v1117 = vmul.f32 %v777, %v1104
        %v1118 = vmul.f32 %v778, %v1108
        %v1119 = vmul.f32 %v779, %v1104
        %v1120 = vmul.f32 %v780, %v1108
        %v1121 = vmul.f32 %v781, %v1104
        %v1122 = vmul.f32 %v782, %v1108
        %v1123 = vmul.f32 %v783, %v1104
        %v1124 = vmul.f32 %v784, %v1108
        %v1125 = vmul.f32 %v785, %v1104
        %v1126 = vmul.f32 %v786, %v1108
        %v1127 = vmul.f32 %v787, %v1104
        %v1128 = vmul.f32 %v788, %v1108
        %v1129 = vmul.f32 %v789, %v1104
        %v1130 = vmul.f32 %v790, %v1108
        %v1131 = vmul.f32 %v791, %v1104
        %v1132 = vmul.f32 %v792, %v1108
        %v1133 = vmul.f32 %v793, %v1104
        %v1134 = vmul.f32 %v794, %v1108
        %v1135 = vmul.f32 %v795, %v1104
        %v1136 = vmul.f32 %v796, %v1108
        %v1137 = vmul.f32 %v797, %v1104
        %v1138 = vmul.f32 %v798, %v1108
        %v1139 = vmul.f32 %v799, %v1104
        %v1140 = vmul.f32 %v800, %v1108
        %v1141 = vadd.f32 %v1069, %v1109
        %v1142 = vadd.f32 %v1070, %v1110
        %v1143 = vadd.f32 %v1071, %v1111
        %v1144 = vadd.f32 %v1072, %v1112
        %v1145 = vadd.f32 %v1073, %v1113
        %v1146 = vadd.f32 %v1074, %v1114
        %v1147 = vadd.f32 %v1075, %v1115
        %v1148 = vadd.f32 %v1076, %v1116
        %v1149 = vadd.f32 %v1077, %v1117
        %v1150 = vadd.f32 %v1078, %v1118
        %v1151 = vadd.f32 %v1079, %v1119
        %v1152 = vadd.f32 %v1080, %v1120
        %v1153 = vadd.f32 %v1081, %v1121
        %v1154 = vadd.f32 %v1082, %v1122
        %v1155 = vadd.f32 %v1083, %v1123
        %v1156 = vadd.f32 %v1084, %v1124
        %v1157 = vadd.f32 %v1085, %v1125
        %v1158 = vadd.f32 %v1086, %v1126
        %v1159 = vadd.f32 %v1087, %v1127
        %v1160 = vadd.f32 %v1088, %v1128
        %v1161 = vadd.f32 %v1089, %v1129
        %v1162 = vadd.f32 %v1090, %v1130
        %v1163 = vadd.f32 %v1091, %v1131
        %v1164 = vadd.f32 %v1092, %v1132
        %v1165 = vadd.f32 %v1093, %v1133
        %v1166 = vadd.f32 %v1094, %v1134
        %v1167 = vadd.f32 %v1095, %v1135
        %v1168 = vadd.f32 %v1096, %v1136
        %v1169 = vadd.f32 %v1097, %v1137
        %v1170 = vadd.f32 %v1098, %v1138
        %v1171 = vadd.f32 %v1099, %v1139
        %v1172 = vadd.f32 %v1100, %v1140
        %v1173 = vlaneseq
        %v1174 = vshrl.u32 %v1173, 7
        %v1175 = vsub.s32 2, %v1174
        %v1176 = vrot.slane %v801, %v1175
        %v1177 = vlaneseq
        %v1178 = vshrl.u32 %v1177, 7
        %v1179 = vsub.s32 2, %v1178
        %v1180 = vrot.slane %v802, %v1179
        %v1181 = vmul.f32 %v761, %v1176
        %v1182 = vmul.f32 %v762, %v1180
        %v1183 = vmul.f32 %v763, %v1176
        %v1184 = vmul.f32 %v764, %v1180
        %v1185 = vmul.f32 %v765, %v1176
        %v1186 = vmul.f32 %v766, %v1180
        %v1187 = vmul.f32 %v767, %v1176
        %v1188 = vmul.f32 %v768, %v1180
        %v1189 = vmul.f32 %v769, %v1176
        %v1190 = vmul.f32 %v770, %v1180
        %v1191 = vmul.f32 %v771, %v1176
        %v1192 = vmul.f32 %v772, %v1180
        %v1193 = vmul.f32 %v773, %v1176
        %v1194 = vmul.f32 %v774, %v1180
        %v1195 = vmul.f32 %v775, %v1176
        %v1196 = vmul.f32 %v776, %v1180
        %v1197 = vmul.f32 %v777, %v1176
        %v1198 = vmul.f32 %v778, %v1180
        %v1199 = vmul.f32 %v779, %v1176
        %v1200 = vmul.f32 %v780, %v1180
        %v1201 = vmul.f32 %v781, %v1176
        %v1202 = vmul.f32 %v782, %v1180
        %v1203 = vmul.f32 %v783, %v1176
        %v1204 = vmul.f32 %v784, %v1180
        %v1205 = vmul.f32 %v785, %v1176
        %v1206 = vmul.f32 %v786, %v1180
        %v1207 = vmul.f32 %v787, %v1176
        %v1208 = vmul.f32 %v788, %v1180
        %v1209 = vmul.f32 %v789, %v1176
        %v1210 = vmul.f32 %v790, %v1180
        %v1211 = vmul.f32 %v791, %v1176
        %v1212 = vmul.f32 %v792, %v1180
        %v1213 = vlaneseq
        %v1214 = vshrl.u32 %v1213, 7
        %v1215 = vsub.s32 5, %v1214
        %v1216 = vrot.slane %v801, %v1215
        %v1217 = vlaneseq
        %v1218 = vshrl.u32 %v1217, 7
        %v1219 = vsub.s32 5, %v1218
        %v1220 = vrot.slane %v802, %v1219
        %v1221 = vmul.f32 %v765, %v1216
        %v1222 = vmul.f32 %v766, %v1220
        %v1223 = vmul.f32 %v767, %v1216
        %v1224 = vmul.f32 %v768, %v1220
        %v1225 = vmul.f32 %v769, %v1216
        %v1226 = vmul.f32 %v770, %v1220
        %v1227 = vmul.f32 %v771, %v1216
        %v1228 = vmul.f32 %v772, %v1220
        %v1229 = vmul.f32 %v773, %v1216
        %v1230 = vmul.f32 %v774, %v1220
        %v1231 = vmul.f32 %v775, %v1216
        %v1232 = vmul.f32 %v776, %v1220
        %v1233 = vmul.f32 %v777, %v1216
        %v1234 = vmul.f32 %v778, %v1220
        %v1235 = vmul.f32 %v779, %v1216
        %v1236 = vmul.f32 %v780, %v1220
        %v1237 = vmul.f32 %v781, %v1216
        %v1238 = vmul.f32 %v782, %v1220
        %v1239 = vmul.f32 %v783, %v1216
        %v1240 = vmul.f32 %v784, %v1220
        %v1241 = vmul.f32 %v785, %v1216
        %v1242 = vmul.f32 %v786, %v1220
        %v1243 = vmul.f32 %v787, %v1216
        %v1244 = vmul.f32 %v788, %v1220
        %v1245 = vmul.f32 %v789, %v1216
        %v1246 = vmul.f32 %v790, %v1220
        %v1247 = vmul.f32 %v791, %v1216
        %v1248 = vmul.f32 %v792, %v1220
        %v1249 = vmul.f32 %v793, %v1216
        %v1250 = vmul.f32 %v794, %v1220
        %v1251 = vmul.f32 %v795, %v1216
        %v1252 = vmul.f32 %v796, %v1220
        %v1253 = vadd.f32 %v1181, %v1221
        %v1254 = vadd.f32 %v1182, %v1222
        %v1255 = vadd.f32 %v1183, %v1223
        %v1256 = vadd.f32 %v1184, %v1224
        %v1257 = vadd.f32 %v1185, %v1225
        %v1258 = vadd.f32 %v1186, %v1226
        %v1259 = vadd.f32 %v1187, %v1227
        %v1260 = vadd.f32 %v1188, %v1228
        %v1261 = vadd.f32 %v1189, %v1229
        %v1262 = vadd.f32 %v1190, %v1230
        %v1263 = vadd.f32 %v1191, %v1231
        %v1264 = vadd.f32 %v1192, %v1232
        %v1265 = vadd.f32 %v1193, %v1233
        %v1266 = vadd.f32 %v1194, %v1234
        %v1267 = vadd.f32 %v1195, %v1235
        %v1268 = vadd.f32 %v1196, %v1236
        %v1269 = vadd.f32 %v1197, %v1237
        %v1270 = vadd.f32 %v1198, %v1238
        %v1271 = vadd.f32 %v1199, %v1239
        %v1272 = vadd.f32 %v1200, %v1240
        %v1273 = vadd.f32 %v1201, %v1241
        %v1274 = vadd.f32 %v1202, %v1242
        %v1275 = vadd.f32 %v1203, %v1243
        %v1276 = vadd.f32 %v1204, %v1244
        %v1277 = vadd.f32 %v1205, %v1245
        %v1278 = vadd.f32 %v1206, %v1246
        %v1279 = vadd.f32 %v1207, %v1247
        %v1280 = vadd.f32 %v1208, %v1248
        %v1281 = vadd.f32 %v1209, %v1249
        %v1282 = vadd.f32 %v1210, %v1250
        %v1283 = vadd.f32 %v1211, %v1251
        %v1284 = vadd.f32 %v1212, %v1252
        %v1285 = vlaneseq
        %v1286 = vshrl.u32 %v1285, 7
        %v1287 = vsub.s32 0, %v1286
        %v1288 = vrot.slane %v803, %v1287
        %v1289 = vlaneseq
        %v1290 = vshrl.u32 %v1289, 7
        %v1291 = vsub.s32 0, %v1290
        %v1292 = vrot.slane %v804, %v1291
        %v1293 = vmul.f32 %v769, %v1288
        %v1294 = vmul.f32 %v770, %v1292
        %v1295 = vmul.f32 %v771, %v1288
        %v1296 = vmul.f32 %v772, %v1292
        %v1297 = vmul.f32 %v773, %v1288
        %v1298 = vmul.f32 %v774, %v1292
        %v1299 = vmul.f32 %v775, %v1288
        %v1300 = vmul.f32 %v776, %v1292
        %v1301 = vmul.f32 %v777, %v1288
        %v1302 = vmul.f32 %v778, %v1292
        %v1303 = vmul.f32 %v779, %v1288
        %v1304 = vmul.f32 %v780, %v1292
        %v1305 = vmul.f32 %v781, %v1288
        %v1306 = vmul.f32 %v782, %v1292
        %v1307 = vmul.f32 %v783, %v1288
        %v1308 = vmul.f32 %v784, %v1292
        %v1309 = vmul.f32 %v785, %v1288
        %v1310 = vmul.f32 %v786, %v1292
        %v1311 = vmul.f32 %v787, %v1288
        %v1312 = vmul.f32 %v788, %v1292
        %v1313 = vmul.f32 %v789, %v1288
        %v1314 = vmul.f32 %v790, %v1292
        %v1315 = vmul.f32 %v791, %v1288
        %v1316 = vmul.f32 %v792, %v1292
        %v1317 = vmul.f32 %v793, %v1288
        %v1318 = vmul.f32 %v794, %v1292
        %v1319 = vmul.f32 %v795, %v1288
        %v1320 = vmul.f32 %v796, %v1292
        %v1321 = vmul.f32 %v797, %v1288
        %v1322 = vmul.f32 %v798, %v1292
        %v1323 = vmul.f32 %v799, %v1288
        %v1324 = vmul.f32 %v800, %v1292
        %v1325 = vadd.f32 %v1253, %v1293
        %v1326 = vadd.f32 %v1254, %v1294
        %v1327 = vadd.f32 %v1255, %v1295
        %v1328 = vadd.f32 %v1256, %v1296
        %v1329 = vadd.f32 %v1257, %v1297
        %v1330 = vadd.f32 %v1258, %v1298
        %v1331 = vadd.f32 %v1259, %v1299
        %v1332 = vadd.f32 %v1260, %v1300
        %v1333 = vadd.f32 %v1261, %v1301
        %v1334 = vadd.f32 %v1262, %v1302
        %v1335 = vadd.f32 %v1263, %v1303
        %v1336 = vadd.f32 %v1264, %v1304
        %v1337 = vadd.f32 %v1265, %v1305
        %v1338 = vadd.f32 %v1266, %v1306
        %v1339 = vadd.f32 %v1267, %v1307
        %v1340 = vadd.f32 %v1268, %v1308
        %v1341 = vadd.f32 %v1269, %v1309
        %v1342 = vadd.f32 %v1270, %v1310
        %v1343 = vadd.f32 %v1271, %v1311
        %v1344 = vadd.f32 %v1272, %v1312
        %v1345 = vadd.f32 %v1273, %v1313
        %v1346 = vadd.f32 %v1274, %v1314
        %v1347 = vadd.f32 %v1275, %v1315
        %v1348 = vadd.f32 %v1276, %v1316
        %v1349 = vadd.f32 %v1277, %v1317
        %v1350 = vadd.f32 %v1278, %v1318
        %v1351 = vadd.f32 %v1279, %v1319
        %v1352 = vadd.f32 %v1280, %v1320
        %v1353 = vadd.f32 %v1281, %v1321
        %v1354 = vadd.f32 %v1282, %v1322
        %v1355 = vadd.f32 %v1283, %v1323
        %v1356 = vadd.f32 %v1284, %v1324
        %vm1389 = vcmask 1040384
        %v1390 = vrot.slane %v1141, 7
        %v1391 = vrot.slane %v1142, 7
        %v1392 = vrot.slane %v1143, 7
        %v1393 = vsel %vm1389, %v1390, %v1392
        %v1394 = vrot.slane %v1144, 7
        %v1395 = vsel %vm1389, %v1391, %v1394
        %v1396 = vrot.slane %v1145, 7
        %v1397 = vrot.slane %v1146, 7
        %v1398 = vrot.slane %v1147, 7
        %v1399 = vsel %vm1389, %v1396, %v1398
        %v1400 = vrot.slane %v1148, 7
        %v1401 = vsel %vm1389, %v1397, %v1400
        %v1402 = vrot.slane %v1149, 7
        %v1403 = vrot.slane %v1150, 7
        %v1404 = vrot.slane %v1151, 7
        %v1405 = vsel %vm1389, %v1402, %v1404
        %v1406 = vrot.slane %v1152, 7
        %v1407 = vsel %vm1389, %v1403, %v1406
        %v1408 = vrot.slane %v1153, 7
        %v1409 = vrot.slane %v1154, 7
        %v1410 = vrot.slane %v1155, 7
        %v1411 = vsel %vm1389, %v1408, %v1410
        %v1412 = vrot.slane %v1156, 7
        %v1413 = vsel %vm1389, %v1409, %v1412
        %v1414 = vrot.slane %v1157, 7
        %v1415 = vrot.slane %v1158, 7
        %v1416 = vrot.slane %v1159, 7
        %v1417 = vsel %vm1389, %v1414, %v1416
        %v1418 = vrot.slane %v1160, 7
        %v1419 = vsel %vm1389, %v1415, %v1418
        %v1420 = vrot.slane %v1161, 7
        %v1421 = vrot.slane %v1162, 7
        %v1422 = vrot.slane %v1163, 7
        %v1423 = vsel %vm1389, %v1420, %v1422
        %v1424 = vrot.slane %v1164, 7
        %v1425 = vsel %vm1389, %v1421, %v1424
        %v1426 = vrot.slane %v1165, 7
        %v1427 = vrot.slane %v1166, 7
        %v1428 = vrot.slane %v1167, 7
        %v1429 = vsel %vm1389, %v1426, %v1428
        %v1430 = vrot.slane %v1168, 7
        %v1431 = vsel %vm1389, %v1427, %v1430
        %v1432 = vrot.slane %v1169, 7
        %v1433 = vrot.slane %v1170, 7
        %v1434 = vrot.slane %v1171, 7
        %v1435 = vsel %vm1389, %v1432, %v1434
        %v1436 = vrot.slane %v1172, 7
        %v1437 = vsel %vm1389, %v1433, %v1436
        %v1470 = vsel %vm1389, 0.0, %v1390
        %v1471 = vsel %vm1389, 0.0, %v1391
        %v1472 = vsel %vm1389, 0.0, %v1396
        %v1473 = vsel %vm1389, 0.0, %v1397
        %v1474 = vsel %vm1389, 0.0, %v1402
        %v1475 = vsel %vm1389, 0.0, %v1403
        %v1476 = vsel %vm1389, 0.0, %v1408
        %v1477 = vsel %vm1389, 0.0, %v1409
        %v1478 = vsel %vm1389, 0.0, %v1414
        %v1479 = vsel %vm1389, 0.0, %v1415
        %v1480 = vsel %vm1389, 0.0, %v1420
        %v1481 = vsel %vm1389, 0.0, %v1421
        %v1482 = vsel %vm1389, 0.0, %v1426
        %v1483 = vsel %vm1389, 0.0, %v1427
        %v1484 = vsel %vm1389, 0.0, %v1432
        %v1485 = vsel %vm1389, 0.0, %v1433
        %v1486 = vadd.f32 %v957, %v1470
        %v1487 = vadd.f32 %v958, %v1471
        %v1488 = vadd.f32 %v959, %v1393
        %v1489 = vadd.f32 %v960, %v1395
        %v1490 = vadd.f32 %v961, %v1472
        %v1491 = vadd.f32 %v962, %v1473
        %v1492 = vadd.f32 %v963, %v1399
        %v1493 = vadd.f32 %v964, %v1401
        %v1494 = vadd.f32 %v965, %v1474
        %v1495 = vadd.f32 %v966, %v1475
        %v1496 = vadd.f32 %v967, %v1405
        %v1497 = vadd.f32 %v968, %v1407
        %v1498 = vadd.f32 %v969, %v1476
        %v1499 = vadd.f32 %v970, %v1477
        %v1500 = vadd.f32 %v971, %v1411
        %v1501 = vadd.f32 %v972, %v1413
        %v1502 = vadd.f32 %v973, %v1478
        %v1503 = vadd.f32 %v974, %v1479
        %v1504 = vadd.f32 %v975, %v1417
        %v1505 = vadd.f32 %v976, %v1419
        %v1506 = vadd.f32 %v977, %v1480
        %v1507 = vadd.f32 %v978, %v1481
        %v1508 = vadd.f32 %v979, %v1423
        %v1509 = vadd.f32 %v980, %v1425
        %v1510 = vadd.f32 %v981, %v1482
        %v1511 = vadd.f32 %v982, %v1483
        %v1512 = vadd.f32 %v983, %v1429
        %v1513 = vadd.f32 %v984, %v1431
        %v1514 = vadd.f32 %v985, %v1484
        %v1515 = vadd.f32 %v986, %v1485
        %v1516 = vadd.f32 %v987, %v1435
        %v1517 = vadd.f32 %v988, %v1437
        %vm1550 = vcmask 1046528
        %v1551 = vrot.slane %v1325, 1
        %v1552 = vrot.slane %v1327, 1
        %v1553 = vsel %vm1550, %v1551, %v1552
        %v1554 = vrot.slane %v1326, 1
        %v1555 = vrot.slane %v1328, 1
        %v1556 = vsel %vm1550, %v1554, %v1555
        %v1557 = vrot.slane %v1329, 1
        %v1558 = vrot.slane %v1331, 1
        %v1559 = vsel %vm1550, %v1557, %v1558
        %v1560 = vrot.slane %v1330, 1
        %v1561 = vrot.slane %v1332, 1
        %v1562 = vsel %vm1550, %v1560, %v1561
        %v1563 = vrot.slane %v1333, 1
        %v1564 = vrot.slane %v1335, 1
        %v1565 = vsel %vm1550, %v1563, %v1564
        %v1566 = vrot.slane %v1334, 1
        %v1567 = vrot.slane %v1336, 1
        %v1568 = vsel %vm1550, %v1566, %v1567
        %v1569 = vrot.slane %v1337, 1
        %v1570 = vrot.slane %v1339, 1
        %v1571 = vsel %vm1550, %v1569, %v1570
        %v1572 = vrot.slane %v1338, 1
        %v1573 = vrot.slane %v1340, 1
        %v1574 = vsel %vm1550, %v1572, %v1573
        %v1575 = vrot.slane %v1341, 1
        %v1576 = vrot.slane %v1343, 1
        %v1577 = vsel %vm1550, %v1575, %v1576
        %v1578 = vrot.slane %v1342, 1
        %v1579 = vrot.slane %v1344, 1
        %v1580 = vsel %vm1550, %v1578, %v1579
        %v1581 = vrot.slane %v1345, 1
        %v1582 = vrot.slane %v1347, 1
        %v1583 = vsel %vm1550, %v1581, %v1582
        %v1584 = vrot.slane %v1346, 1
        %v1585 = vrot.slane %v1348, 1
        %v1586 = vsel %vm1550, %v1584, %v1585
        %v1587 = vrot.slane %v1349, 1
        %v1588 = vrot.slane %v1351, 1
        %v1589 = vsel %vm1550, %v1587, %v1588
        %v1590 = vrot.slane %v1350, 1
        %v1591 = vrot.slane %v1352, 1
        %v1592 = vsel %vm1550, %v1590, %v1591
        %v1593 = vrot.slane %v1353, 1
        %v1594 = vrot.slane %v1355, 1
        %v1595 = vsel %vm1550, %v1593, %v1594
        %v1596 = vrot.slane %v1354, 1
        %v1597 = vrot.slane %v1356, 1
        %v1598 = vsel %vm1550, %v1596, %v1597
        %v1631 = vsel %vm1550, %v1552, 0.0
        %v1632 = vsel %vm1550, %v1555, 0.0
        %v1633 = vsel %vm1550, %v1558, 0.0
        %v1634 = vsel %vm1550, %v1561, 0.0
        %v1635 = vsel %vm1550, %v1564, 0.0
        %v1636 = vsel %vm1550, %v1567, 0.0
        %v1637 = vsel %vm1550, %v1570, 0.0
        %v1638 = vsel %vm1550, %v1573, 0.0
        %v1639 = vsel %vm1550, %v1576, 0.0
        %v1640 = vsel %vm1550, %v1579, 0.0
        %v1641 = vsel %vm1550, %v1582, 0.0
        %v1642 = vsel %vm1550, %v1585, 0.0
        %v1643 = vsel %vm1550, %v1588, 0.0
        %v1644 = vsel %vm1550, %v1591, 0.0
        %v1645 = vsel %vm1550, %v1594, 0.0
        %v1646 = vsel %vm1550, %v1597, 0.0
        %v1647 = vadd.f32 %v1486, %v1553
        %v1648 = vadd.f32 %v1487, %v1556
        %v1649 = vadd.f32 %v1488, %v1631
        %v1650 = vadd.f32 %v1489, %v1632
        %v1651 = vadd.f32 %v1490, %v1559
        %v1652 = vadd.f32 %v1491, %v1562
        %v1653 = vadd.f32 %v1492, %v1633
        %v1654 = vadd.f32 %v1493, %v1634
        %v1655 = vadd.f32 %v1494, %v1565
        %v1656 = vadd.f32 %v1495, %v1568
        %v1657 = vadd.f32 %v1496, %v1635
        %v1658 = vadd.f32 %v1497, %v1636
        %v1659 = vadd.f32 %v1498, %v1571
        %v1660 = vadd.f32 %v1499, %v1574
        %v1661 = vadd.f32 %v1500, %v1637
        %v1662 = vadd.f32 %v1501, %v1638
        %v1663 = vadd.f32 %v1502, %v1577
        %v1664 = vadd.f32 %v1503, %v1580
        %v1665 = vadd.f32 %v1504, %v1639
        %v1666 = vadd.f32 %v1505, %v1640
        %v1667 = vadd.f32 %v1506, %v1583
        %v1668 = vadd.f32 %v1507, %v1586
        %v1669 = vadd.f32 %v1508, %v1641
        %v1670 = vadd.f32 %v1509, %v1642
        %v1671 = vadd.f32 %v1510, %v1589
        %v1672 = vadd.f32 %v1511, %v1592
        %v1673 = vadd.f32 %v1512, %v1643
        %v1674 = vadd.f32 %v1513, %v1644
        %v1675 = vadd.f32 %v1514, %v1595
        %v1676 = vadd.f32 %v1515, %v1598
        %v1677 = vadd.f32 %v1516, %v1645
        %v1678 = vadd.f32 %v1517, %v1646
        %v1679 = vld [vmem:[%s6] sm:$0x3]
        %v1681 = vlaneseq
        %v1682 = vshrl.u32 %v1681, 7
        %v1683 = vsub.s32 0, %v1682
        %v1684 = vrot.slane %v1679, %v1683
        %v1685 = vlaneseq
        %v1686 = vshrl.u32 %v1685, 7
        %v1687 = vsub.s32 1, %v1686
        %v1688 = vrot.slane %v1679, %v1687
        %v1691 = vadd.f32 %v1647, %v1684
        %v1692 = vadd.f32 %v1648, %v1688
        %v1693 = vadd.f32 %v1649, %v1684
        %v1694 = vadd.f32 %v1650, %v1688
        %v1695 = vadd.f32 %v1651, %v1684
        %v1696 = vadd.f32 %v1652, %v1688
        %v1697 = vadd.f32 %v1653, %v1684
        %v1698 = vadd.f32 %v1654, %v1688
        %v1699 = vadd.f32 %v1655, %v1684
        %v1700 = vadd.f32 %v1656, %v1688
        %v1701 = vadd.f32 %v1657, %v1684
        %v1702 = vadd.f32 %v1658, %v1688
        %v1703 = vadd.f32 %v1659, %v1684
        %v1704 = vadd.f32 %v1660, %v1688
        %v1705 = vadd.f32 %v1661, %v1684
        %v1706 = vadd.f32 %v1662, %v1688
        %v1707 = vadd.f32 %v1663, %v1684
        %v1708 = vadd.f32 %v1664, %v1688
        %v1709 = vadd.f32 %v1665, %v1684
        %v1710 = vadd.f32 %v1666, %v1688
        %v1711 = vadd.f32 %v1667, %v1684
        %v1712 = vadd.f32 %v1668, %v1688
        %v1713 = vadd.f32 %v1669, %v1684
        %v1714 = vadd.f32 %v1670, %v1688
        %v1715 = vadd.f32 %v1671, %v1684
        %v1716 = vadd.f32 %v1672, %v1688
        %v1717 = vadd.f32 %v1673, %v1684
        %v1718 = vadd.f32 %v1674, %v1688
        %v1719 = vadd.f32 %v1675, %v1684
        %v1720 = vadd.f32 %v1676, %v1688
        %v1721 = vadd.f32 %v1677, %v1684
        %v1722 = vadd.f32 %v1678, %v1688
        %v1723 = vmul.f32 %v1691, %v1691
        %v1724 = vmul.f32 %v1693, %v1693
        %v1725 = vmul.f32 %v1695, %v1695
        %v1726 = vmul.f32 %v1697, %v1697
        %v1727 = vmul.f32 %v1699, %v1699
        %v1728 = vmul.f32 %v1701, %v1701
        %v1729 = vmul.f32 %v1703, %v1703
        %v1730 = vmul.f32 %v1705, %v1705
        %v1731 = vmul.f32 %v1707, %v1707
        %v1732 = vmul.f32 %v1709, %v1709
        %v1733 = vmul.f32 %v1711, %v1711
        %v1734 = vmul.f32 %v1713, %v1713
        %v1735 = vmul.f32 %v1715, %v1715
        %v1736 = vmul.f32 %v1717, %v1717
        %v1737 = vmul.f32 %v1719, %v1719
        %v1738 = vmul.f32 %v1721, %v1721
        %v1739 = vmul.f32 %v1691, %v1723
        %v1740 = vmul.f32 %v1693, %v1724
        %v1741 = vmul.f32 %v1695, %v1725
        %v1742 = vmul.f32 %v1697, %v1726
        %v1743 = vmul.f32 %v1699, %v1727
        %v1744 = vmul.f32 %v1701, %v1728
        %v1745 = vmul.f32 %v1703, %v1729
        %v1746 = vmul.f32 %v1705, %v1730
        %v1747 = vmul.f32 %v1707, %v1731
        %v1748 = vmul.f32 %v1709, %v1732
        %v1749 = vmul.f32 %v1711, %v1733
        %v1750 = vmul.f32 %v1713, %v1734
        %v1751 = vmul.f32 %v1715, %v1735
        %v1752 = vmul.f32 %v1717, %v1736
        %v1753 = vmul.f32 %v1719, %v1737
        %v1754 = vmul.f32 %v1721, %v1738
        %v1755 = vmul.f32 %v1739, 0.044715
        %v1756 = vmul.f32 %v1740, 0.044715
        %v1757 = vmul.f32 %v1741, 0.044715
        %v1758 = vmul.f32 %v1742, 0.044715
        %v1759 = vmul.f32 %v1743, 0.044715
        %v1760 = vmul.f32 %v1744, 0.044715
        %v1761 = vmul.f32 %v1745, 0.044715
        %v1762 = vmul.f32 %v1746, 0.044715
        %v1763 = vmul.f32 %v1747, 0.044715
        %v1764 = vmul.f32 %v1748, 0.044715
        %v1765 = vmul.f32 %v1749, 0.044715
        %v1766 = vmul.f32 %v1750, 0.044715
        %v1767 = vmul.f32 %v1751, 0.044715
        %v1768 = vmul.f32 %v1752, 0.044715
        %v1769 = vmul.f32 %v1753, 0.044715
        %v1770 = vmul.f32 %v1754, 0.044715
        %v1771 = vadd.f32 %v1691, %v1755
        %v1772 = vadd.f32 %v1693, %v1756
        %v1773 = vadd.f32 %v1695, %v1757
        %v1774 = vadd.f32 %v1697, %v1758
        %v1775 = vadd.f32 %v1699, %v1759
        %v1776 = vadd.f32 %v1701, %v1760
        %v1777 = vadd.f32 %v1703, %v1761
        %v1778 = vadd.f32 %v1705, %v1762
        %v1779 = vadd.f32 %v1707, %v1763
        %v1780 = vadd.f32 %v1709, %v1764
        %v1781 = vadd.f32 %v1711, %v1765
        %v1782 = vadd.f32 %v1713, %v1766
        %v1783 = vadd.f32 %v1715, %v1767
        %v1784 = vadd.f32 %v1717, %v1768
        %v1785 = vadd.f32 %v1719, %v1769
        %v1786 = vadd.f32 %v1721, %v1770
        %v1787 = vmul.f32 %v1771, 0.7978846
        %v1788 = vmul.f32 %v1772, 0.7978846
        %v1789 = vmul.f32 %v1773, 0.7978846
        %v1790 = vmul.f32 %v1774, 0.7978846
        %v1791 = vmul.f32 %v1775, 0.7978846
        %v1792 = vmul.f32 %v1776, 0.7978846
        %v1793 = vmul.f32 %v1777, 0.7978846
        %v1794 = vmul.f32 %v1778, 0.7978846
        %v1795 = vmul.f32 %v1779, 0.7978846
        %v1796 = vmul.f32 %v1780, 0.7978846
        %v1797 = vmul.f32 %v1781, 0.7978846
        %v1798 = vmul.f32 %v1782, 0.7978846
        %v1799 = vmul.f32 %v1783, 0.7978846
        %v1800 = vmul.f32 %v1784, 0.7978846
        %v1801 = vmul.f32 %v1785, 0.7978846
        %v1802 = vmul.f32 %v1786, 0.7978846
        %v1803 = vtanh.pop %v1787
        %v1804 = vtanh.pop %v1788
        %v1805 = vtanh.pop %v1789
        %v1806 = vtanh.pop %v1790
        %v1807 = vtanh.pop %v1791
        %v1808 = vtanh.pop %v1792
        %v1809 = vtanh.pop %v1793
        %v1810 = vtanh.pop %v1794
        %v1811 = vtanh.pop %v1795
        %v1812 = vtanh.pop %v1796
        %v1813 = vtanh.pop %v1797
        %v1814 = vtanh.pop %v1798
        %v1815 = vtanh.pop %v1799
        %v1816 = vtanh.pop %v1800
        %v1817 = vtanh.pop %v1801
        %v1818 = vtanh.pop %v1802
        %v1819 = vadd.f32 %v1803, 1.0
        %v1820 = vadd.f32 %v1804, 1.0
        %v1821 = vadd.f32 %v1805, 1.0
        %v1822 = vadd.f32 %v1806, 1.0
        %v1823 = vadd.f32 %v1807, 1.0
        %v1824 = vadd.f32 %v1808, 1.0
        %v1825 = vadd.f32 %v1809, 1.0
        %v1826 = vadd.f32 %v1810, 1.0
        %v1827 = vadd.f32 %v1811, 1.0
        %v1828 = vadd.f32 %v1812, 1.0
        %v1829 = vadd.f32 %v1813, 1.0
        %v1830 = vadd.f32 %v1814, 1.0
        %v1831 = vadd.f32 %v1815, 1.0
        %v1832 = vadd.f32 %v1816, 1.0
        %v1833 = vadd.f32 %v1817, 1.0
        %v1834 = vadd.f32 %v1818, 1.0
        %v1835 = vmul.f32 %v1819, 0.5
        %v1836 = vmul.f32 %v1820, 0.5
        %v1837 = vmul.f32 %v1821, 0.5
        %v1838 = vmul.f32 %v1822, 0.5
        %v1839 = vmul.f32 %v1823, 0.5
        %v1840 = vmul.f32 %v1824, 0.5
        %v1841 = vmul.f32 %v1825, 0.5
        %v1842 = vmul.f32 %v1826, 0.5
        %v1843 = vmul.f32 %v1827, 0.5
        %v1844 = vmul.f32 %v1828, 0.5
        %v1845 = vmul.f32 %v1829, 0.5
        %v1846 = vmul.f32 %v1830, 0.5
        %v1847 = vmul.f32 %v1831, 0.5
        %v1848 = vmul.f32 %v1832, 0.5
        %v1849 = vmul.f32 %v1833, 0.5
        %v1850 = vmul.f32 %v1834, 0.5
        %v1851 = vmul.f32 %v1691, %v1835
        %v1852 = vmul.f32 %v1693, %v1836
        %v1853 = vmul.f32 %v1695, %v1837
        %v1854 = vmul.f32 %v1697, %v1838
        %v1855 = vmul.f32 %v1699, %v1839
        %v1856 = vmul.f32 %v1701, %v1840
        %v1857 = vmul.f32 %v1703, %v1841
        %v1858 = vmul.f32 %v1705, %v1842
        %v1859 = vmul.f32 %v1707, %v1843
        %v1860 = vmul.f32 %v1709, %v1844
        %v1861 = vmul.f32 %v1711, %v1845
        %v1862 = vmul.f32 %v1713, %v1846
        %v1863 = vmul.f32 %v1715, %v1847
        %v1864 = vmul.f32 %v1717, %v1848
        %v1865 = vmul.f32 %v1719, %v1849
        %v1866 = vmul.f32 %v1721, %v1850
        %v1867 = vmul.f32 %v1851, %v1692
        %v1868 = vmul.f32 %v1852, %v1694
        %v1869 = vmul.f32 %v1853, %v1696
        %v1870 = vmul.f32 %v1854, %v1698
        %v1871 = vmul.f32 %v1855, %v1700
        %v1872 = vmul.f32 %v1856, %v1702
        %v1873 = vmul.f32 %v1857, %v1704
        %v1874 = vmul.f32 %v1858, %v1706
        %v1875 = vmul.f32 %v1859, %v1708
        %v1876 = vmul.f32 %v1860, %v1710
        %v1877 = vmul.f32 %v1861, %v1712
        %v1878 = vmul.f32 %v1862, %v1714
        %v1879 = vmul.f32 %v1863, %v1716
        %v1880 = vmul.f32 %v1864, %v1718
        %v1881 = vmul.f32 %v1865, %v1720
        %v1882 = vmul.f32 %v1866, %v1722
        %v1883 = vpack.c.bf16 %v1868, %v1867
        %v1884 = vpack.c.bf16 %v1870, %v1869
        %v1885 = vpack.c.bf16 %v1872, %v1871
        %v1886 = vpack.c.bf16 %v1874, %v1873
        %v1887 = vpack.c.bf16 %v1876, %v1875
        %v1888 = vpack.c.bf16 %v1878, %v1877
        %v1889 = vpack.c.bf16 %v1880, %v1879
        %v1890 = vpack.c.bf16 %v1882, %v1881
        %v1891 = vld [vmem:[%s7] sm:$0xf]
        %v1892 = vld [vmem:[%s7 + $0x4] sm:$0xf]
        %v1893 = vld [vmem:[%s7 + $0x8] sm:$0xf]
        %v1894 = vld [vmem:[%s7 + $0xc] sm:$0xf]
        %v1895 = vld [vmem:[%s7 + $0x10] sm:$0xf]
        %v1896 = vld [vmem:[%s7 + $0x14] sm:$0xf]
        %v1897 = vld [vmem:[%s7 + $0x18] sm:$0xf]
        %v1898 = vld [vmem:[%s7 + $0x1c] sm:$0xf]
        %v1899 = vld [vmem:[%s7 + $0x20] sm:$0xf]
        %v1900 = vld [vmem:[%s7 + $0x24] sm:$0xf]
        %v1901 = vld [vmem:[%s7 + $0x28] sm:$0xf]
        %v1902 = vld [vmem:[%s7 + $0x2c] sm:$0xf]
        %v1903 = vld [vmem:[%s7 + $0x30] sm:$0xf]
        %v1904 = vld [vmem:[%s7 + $0x34] sm:$0xf]
        %v1905 = vld [vmem:[%s7 + $0x38] sm:$0xf]
        %v1906 = vld [vmem:[%s7 + $0x3c] sm:$0xf]
        %v1907 = vld [vmem:[%s8] sm:$0x1]
        %v1909 = vlaneseq
        %v1910 = vshrl.u32 %v1909, 7
        %v1911 = vsub.s32 0, %v1910
        %v1912 = vrot.slane %v1907, %v1911
        %v1930 = vunpack.c.l.b16 %v1891
        %v1931 = vunpack.c.l.b16 %v1892
        %v1932 = vunpack.c.l.b16 %v1893
        %v1933 = vunpack.c.l.b16 %v1894
        %v1934 = vunpack.c.l.b16 %v1895
        %v1935 = vunpack.c.l.b16 %v1896
        %v1936 = vunpack.c.l.b16 %v1897
        %v1937 = vunpack.c.l.b16 %v1898
        %v1938 = vunpack.c.l.b16 %v1899
        %v1939 = vunpack.c.l.b16 %v1900
        %v1940 = vunpack.c.l.b16 %v1901
        %v1941 = vunpack.c.l.b16 %v1902
        %v1942 = vunpack.c.l.b16 %v1903
        %v1943 = vunpack.c.l.b16 %v1904
        %v1944 = vunpack.c.l.b16 %v1905
        %v1945 = vunpack.c.l.b16 %v1906
        %v1946 = vpack.c.b16 %v1931, %v1930
        %v1947 = vpack.c.b16 %v1933, %v1932
        %v1948 = vpack.c.b16 %v1935, %v1934
        %v1949 = vpack.c.b16 %v1937, %v1936
        %v1950 = vpack.c.b16 %v1939, %v1938
        %v1951 = vpack.c.b16 %v1941, %v1940
        %v1952 = vpack.c.b16 %v1943, %v1942
        %v1953 = vpack.c.b16 %v1945, %v1944
        %1962 = vmatprep.subr.bf16.mxu0 0
        %1963 = vmatpush1.bf16.msra.mxu0 %v1946
        %1964 = vmatprep.subr.bf16.mxu0 0
        %1965 = vmatpush1.bf16.msra.mxu0 %v1947
        %1966 = vmatprep.subr.bf16.mxu0 0
        %1967 = vmatpush1.bf16.msra.mxu0 %v1948
        %1968 = vmatprep.subr.bf16.mxu0 0
        %1969 = vmatpush1.bf16.msra.mxu0 %v1949
        %1970 = vmatprep.subr.bf16.mxu0 0
        %1971 = vmatpush1.bf16.msra.mxu0 %v1950
        %1972 = vmatprep.subr.bf16.mxu0 0
        %1973 = vmatpush1.bf16.msra.mxu0 %v1951
        %1974 = vmatprep.subr.bf16.mxu0 0
        %1975 = vmatpush1.bf16.msra.mxu0 %v1952
        %1976 = vmatprep.subr.bf16.mxu0 0
        %1977 = vmatpush1.bf16.msra.mxu0 %v1953
        %1978 = vmatprep.subr.bf16.mxu0 0
        %1979 = vmatpush1.bf16.msra.mxu0 0
        %1980 = vmatprep.subr.bf16.mxu0 0
        %1981 = vmatpush1.bf16.msra.mxu0 0
        %1982 = vmatprep.subr.bf16.mxu0 0
        %1983 = vmatpush1.bf16.msra.mxu0 0
        %1984 = vmatprep.subr.bf16.mxu0 0
        %1985 = vmatpush1.bf16.msra.mxu0 0
        %1986 = vmatprep.subr.bf16.mxu0 0
        %1987 = vmatpush1.bf16.msra.mxu0 0
        %1988 = vmatprep.subr.bf16.mxu0 0
        %1989 = vmatpush1.bf16.msra.mxu0 0
        %1990 = vmatprep.subr.bf16.mxu0 0
        %1991 = vmatpush1.bf16.msra.mxu0 0
        %1992 = vmatprep.subr.bf16.mxu0 0
        %1993 = vmatpush1.bf16.msra.mxu0 0
        %1994 = vmatprep.mubr.bf16.mxu0 0
        %1995 = vmatmul.mubr.bf16.gmra.mrb[0].mxu0 %v1883
        %v1996 = vpop.f32.mrb[0].mxu0
        %v1997 = vadd.f32 %v1912, %v1996
        %v1998 = vpop.f32.mrb[0].mxu0
        %v1999 = vpop.f32.mrb[0].mxu0
        %v2000 = vadd.f32 %v1912, %v1999
        %v2001 = vpop.f32.mrb[0].mxu0
        %2002 = vmatprep.mubr.bf16.mxu0 0
        %2003 = vmatmul.mubr.bf16.gmra.mrb[0].mxu0 %v1884
        %v2004 = vpop.f32.mrb[0].mxu0
        %v2005 = vadd.f32 %v1912, %v2004
        %v2006 = vpop.f32.mrb[0].mxu0
        %v2007 = vpop.f32.mrb[0].mxu0
        %v2008 = vadd.f32 %v1912, %v2007
        %v2009 = vpop.f32.mrb[0].mxu0
        %2010 = vmatprep.mubr.bf16.mxu0 0
        %2011 = vmatmul.mubr.bf16.gmra.mrb[0].mxu0 %v1885
        %v2012 = vpop.f32.mrb[0].mxu0
        %v2013 = vadd.f32 %v1912, %v2012
        %v2014 = vpop.f32.mrb[0].mxu0
        %v2015 = vpop.f32.mrb[0].mxu0
        %v2016 = vadd.f32 %v1912, %v2015
        %v2017 = vpop.f32.mrb[0].mxu0
        %2018 = vmatprep.mubr.bf16.mxu0 0
        %2019 = vmatmul.mubr.bf16.gmra.mrb[0].mxu0 %v1886
        %v2020 = vpop.f32.mrb[0].mxu0
        %v2021 = vadd.f32 %v1912, %v2020
        %v2022 = vpop.f32.mrb[0].mxu0
        %v2023 = vpop.f32.mrb[0].mxu0
        %v2024 = vadd.f32 %v1912, %v2023
        %v2025 = vpop.f32.mrb[0].mxu0
        %2026 = vmatprep.mubr.bf16.mxu0 0
        %2027 = vmatmul.mubr.bf16.gmra.mrb[0].mxu0 %v1887
        %v2028 = vpop.f32.mrb[0].mxu0
        %v2029 = vadd.f32 %v1912, %v2028
        %v2030 = vpop.f32.mrb[0].mxu0
        %v2031 = vpop.f32.mrb[0].mxu0
        %v2032 = vadd.f32 %v1912, %v2031
        %v2033 = vpop.f32.mrb[0].mxu0
        %2034 = vmatprep.mubr.bf16.mxu0 0
        %2035 = vmatmul.mubr.bf16.gmra.mrb[0].mxu0 %v1888
        %v2036 = vpop.f32.mrb[0].mxu0
        %v2037 = vadd.f32 %v1912, %v2036
        %v2038 = vpop.f32.mrb[0].mxu0
        %v2039 = vpop.f32.mrb[0].mxu0
        %v2040 = vadd.f32 %v1912, %v2039
        %v2041 = vpop.f32.mrb[0].mxu0
        %2042 = vmatprep.mubr.bf16.mxu0 0
        %2043 = vmatmul.mubr.bf16.gmra.mrb[0].mxu0 %v1889
        %v2044 = vpop.f32.mrb[0].mxu0
        %v2045 = vadd.f32 %v1912, %v2044
        %v2046 = vpop.f32.mrb[0].mxu0
        %v2047 = vpop.f32.mrb[0].mxu0
        %v2048 = vadd.f32 %v1912, %v2047
        %v2049 = vpop.f32.mrb[0].mxu0
        %2050 = vmatprep.mubr.bf16.mxu0 0
        %2051 = vmatmul.mubr.bf16.gmra.mrb[0].mxu0 %v1890
        %v2052 = vpop.f32.mrb[0].mxu0
        %v2053 = vadd.f32 %v1912, %v2052
        %v2054 = vpop.f32.mrb[0].mxu0
        %v2055 = vpop.f32.mrb[0].mxu0
        %v2056 = vadd.f32 %v1912, %v2055
        %v2057 = vpop.f32.mrb[0].mxu0
        %2058 = vdwg.mxu0
        %2059 = vst [vmem:[%s442] sm:$0xff] %v1997
        %2060 = vst [vmem:[%s442 + $0x8] sm:$0xff] %v2000
        %2061 = vst [vmem:[%s442 + $0x10] sm:$0xff] %v2005
        %2062 = vst [vmem:[%s442 + $0x18] sm:$0xff] %v2008
        %2063 = vst [vmem:[%s442 + $0x20] sm:$0xff] %v2013
        %2064 = vst [vmem:[%s442 + $0x28] sm:$0xff] %v2016
        %2065 = vst [vmem:[%s442 + $0x30] sm:$0xff] %v2021
        %2066 = vst [vmem:[%s442 + $0x38] sm:$0xff] %v2024
        %2067 = vst [vmem:[%s442 + $0x40] sm:$0xff] %v2029
        %2068 = vst [vmem:[%s442 + $0x48] sm:$0xff] %v2032
        %2069 = vst [vmem:[%s442 + $0x50] sm:$0xff] %v2037
        %2070 = vst [vmem:[%s442 + $0x58] sm:$0xff] %v2040
        %2071 = vst [vmem:[%s442 + $0x60] sm:$0xff] %v2045
        %2072 = vst [vmem:[%s442 + $0x68] sm:$0xff] %v2048
        %2073 = vst [vmem:[%s442 + $0x70] sm:$0xff] %v2053
        %2074 = vst [vmem:[%s442 + $0x78] sm:$0xff] %v2056
        %s2075 = sand.u32 %s271, 1
        %s2076 = scalar_lea.sflag [#allocation3], %s2075
        %s2077 = sand.u32 %s271, 1
        %s2078 = smul.addr %s2077, 128
        %s2079 = scalar_lea.vmem [#allocation2], %s2078
        // Predicated region
        $region57: #{tpu_custom_call.1} parent=55 // pred_check
          %p2080 = pneg %p281
        $region58: #{tpu_custom_call.1} parent=55 // pred_check_branch
          %2082 = sbr.rel (%p2080) target = $region60
        $region59: #{tpu_custom_call.1} parent=55 // pred_region
          %s2083 = smul.u32 16, %s28
          %s2085 = ssub.s32 2048, 2048
          %2086 = vsyncadd %s2076, %s2085
          %s2087 = smul.addr %s27, 32
          %s2088 = sadd.s32 %s2083, %s2087
          %s2089 = smul.addr %s2088, 128
          %s2090 = scalar_lea.hbm %s9, %s2089
          %s2091 = sshll.u32 %s2079, 4
          %s2092 = int_to_ptr.vmem [resolvable:$true] %s2091
          %2097 = dma.vmem_to_hbm [thread:$0]  %s2092, 2048, %s2090, %s2076, 128, 128, 8
        $region60: #{tpu_custom_call.1} parent=55 // pred_fallthru
          _
      $region56: #{tpu_custom_call.1} parent=5 // pred_fallthru
        _
      %p2098 = scmp.le.s32.totalorder 2, %s18
      // Predicated region
      $region61: #{tpu_custom_call.1} parent=5 // pred_check
        %p2099 = pneg %p2098
      $region62: #{tpu_custom_call.1} parent=5 // pred_check_branch
        %2101 = sbr.rel (%p2099) target = $region64
      $region63: #{tpu_custom_call.1} parent=5 // pred_region
        %s2102 = ssub.s32 %s18, 2
        // Predicated region
        $region65: #{tpu_custom_call.1} parent=63 // pred_check
          %p2103 = pneg %p287
        $region66: #{tpu_custom_call.1} parent=63 // pred_check_branch
          %2105 = sbr.rel (%p2103) target = $region68
        $region67: #{tpu_custom_call.1} parent=63 // pred_region
          %s2106 = sand.u32 %s272, 1
          %s2107 = scalar_lea.sflag [#allocation3], %s2106
          %s2108 = sand.u32 %s272, 1
          %s2109 = smul.addr %s2108, 128
          %s2110 = scalar_lea.vmem [#allocation2], %s2109
          %2111 = dma.done %s2107, 2048
        $region68: #{tpu_custom_call.1} parent=63 // pred_fallthru
          _
      $region64: #{tpu_custom_call.1} parent=5 // pred_fallthru
        _
    $region6: #{tpu_custom_call.1} parent=1 // loop_footer
      %s22 = sadd.s32 1, %s18
    $region7: #{tpu_custom_call.1} parent=1 // loop_footer_branch
      %17 = sbr.rel target = $region3
    $region8: #{tpu_custom_call.1} parent=1 // loop_exit
      _
    %2112 = vsyncpa [#allocation3], 1
    %s2113 = scalar_lea.sflag [#allocation3], 1
    %2114 = vsyncpa %s2113, 1

</llo_original>
